<compile_context>
chip_gen: v5e
topology: v5e:2x2
jax: 0.10.0
libtpu: 0.0.40
codegen_flags: <defaults>
</compile_context>

<pallas_src>
import jax
import jax.numpy as jnp
import numpy as np
from jax.experimental import pallas as pl
from jax.experimental.pallas import tpu as pltpu


def _attn_decoder_kernel(
    enc_ref,      # (B, T, H)   encoder outputs
    ua_enc_ref,   # (B, T, H)   Ua(encoder_outputs), precomputed outside
    wa_ref,       # (H, H)      Wa^T  (attention)
    va_ref,       # (1, 1, H)   va    (attention)
    wh6_ref,      # (H, 6H)     fused GRU weights, h path:   [gi_r gi_z gi_n gh_r gh_z gh_n]
    wc6_ref,      # (H, 6H)     fused GRU weights, ctx path: [gi_r gi_z gi_n | zeros      ]
    bbig_ref,     # (1, 6H)     fused GRU biases: [b_ih | b_hh]
    out_ref,      # (out_len, B, H)  per-step hidden outputs
    attn_ref,     # (B, T)      last-step attention weights
):
    B, T, H = enc_ref.shape
    out_len = out_ref.shape[0]

    # Hoist all loads / broadcasts out of the decode loop (JAX doesn't CSE them).
    enc = enc_ref[...]                                             # (B, T, H)
    ua_enc = ua_enc_ref[...]                                       # (B, T, H)
    wa_t = wa_ref[...]                                             # (H, H)
    va_b = jnp.broadcast_to(va_ref[...], (B, T, H))                # (B, T, H)
    w_h6 = wh6_ref[...]                                            # (H, 6H)
    w_c6 = wc6_ref[...]                                            # (H, 6H)
    b_big = jnp.broadcast_to(bbig_ref[...], (B, 6 * H))            # (B, 6H)

    def step(t, h):                                                # h: (B, H)
        # ---------------- additive attention ----------------
        wa_h = jnp.dot(h, wa_t, preferred_element_type=jnp.float32)       # (B, H)
        energy = jnp.tanh(wa_h[:, None, :] + ua_enc)                      # (B, T, H)
        scores = jnp.sum(energy * va_b, axis=-1)                          # (B, T)
        m = jnp.max(scores, axis=-1, keepdims=True)
        e = jnp.exp(scores - m)
        attn = e * pl.reciprocal(jnp.sum(e, axis=-1, keepdims=True))      # softmax (B, T)

        # ---------------- context (MXU batched matvec) ----------------
        context = jnp.einsum(
            "bqt,bth->bqh", attn[:, None, :], enc,
            preferred_element_type=jnp.float32,
        )[:, 0, :]                                                        # (B, H)

        # ---------------- fused GRU cell (input == h) ----------------
        gates = (
            jnp.dot(h, w_h6, preferred_element_type=jnp.float32)
            + jnp.dot(context, w_c6, preferred_element_type=jnp.float32)
            + b_big
        )                                                                 # (B, 6H)

        gi_r = gates[:, 0 * H:1 * H]
        gi_z = gates[:, 1 * H:2 * H]
        gi_n = gates[:, 2 * H:3 * H]
        gh_r = gates[:, 3 * H:4 * H]
        gh_z = gates[:, 4 * H:5 * H]
        gh_n = gates[:, 5 * H:6 * H]

        r = jax.nn.sigmoid(gi_r + gh_r)
        z = jax.nn.sigmoid(gi_z + gh_z)
        n = jnp.tanh(gi_n + r * gh_n)
        h_new = (1.0 - z) * n + z * h

        out_ref[t] = h_new
        attn_ref[...] = attn        # VMEM-resident output block; last write wins
        return h_new

    h0 = jnp.zeros((B, H), jnp.float32)
    jax.lax.fori_loop(0, out_len, step, h0, unroll=True)


def attention_decoder_forward(encoder_outputs, params, out_len):
    """Pallas implementation of AttentionDecoder.forward."""
    B, T, H = encoder_outputs.shape
    f32 = jnp.float32

    # ---- parameter re-layout (plain XLA, outside the kernel) ----
    wa_t = params["wa_weight"].T.astype(f32)                      # (H, H)
    ua_t = params["ua_weight"].T.astype(f32)                      # (H, H)
    va = params["va"].reshape(1, 1, H).astype(f32)

    wih_t = params["weight_ih"].T.astype(f32)                     # (2H, 3H), cols [r, z, n]
    whh_t = params["weight_hh"].T.astype(f32)                     # (H, 3H),  cols [r, z, n]
    # gates = h @ W_h6 + ctx @ W_c6 + b_big, columns [gi_r gi_z gi_n gh_r gh_z gh_n]
    w_h6 = jnp.concatenate([wih_t[:H, :], whh_t], axis=1)                       # (H, 6H)
    w_c6 = jnp.concatenate([wih_t[H:, :], jnp.zeros((H, 3 * H), f32)], axis=1)  # (H, 6H)
    b_big = jnp.concatenate(
        [params["bias_ih"], params["bias_hh"]]
    ).reshape(1, 6 * H).astype(f32)                               # (1, 6H)

    # Ua(encoder_outputs): constant across decode steps — precompute with XLA.
    ua_enc = jnp.einsum("bth,hk->btk", encoder_outputs.astype(f32), ua_t)

    grid_spec = pltpu.PrefetchScalarGridSpec(
        num_scalar_prefetch=0,
        grid=(1,),  # whole recurrence runs inside the kernel
        in_specs=[
            pl.BlockSpec((B, T, H), lambda i: (0, 0, 0)),         # encoder_outputs
            pl.BlockSpec((B, T, H), lambda i: (0, 0, 0)),         # Ua(enc)
            pl.BlockSpec((H, H), lambda i: (0, 0)),               # Wa^T
            pl.BlockSpec((1, 1, H), lambda i: (0, 0, 0)),         # va
            pl.BlockSpec((H, 6 * H), lambda i: (0, 0)),           # fused GRU weights (h)
            pl.BlockSpec((H, 6 * H), lambda i: (0, 0)),           # fused GRU weights (ctx)
            pl.BlockSpec((1, 6 * H), lambda i: (0, 0)),           # fused GRU biases
        ],
        out_specs=[
            pl.BlockSpec((out_len, B, H), lambda i: (0, 0, 0)),   # per-step outputs
            pl.BlockSpec((B, T), lambda i: (0, 0)),               # last attn weights
        ],
    )

    outputs, attn = pl.pallas_call(
        _attn_decoder_kernel,
        out_shape=(
            jax.ShapeDtypeStruct((out_len, B, H), f32),
            jax.ShapeDtypeStruct((B, T), f32),
        ),
        grid_spec=grid_spec,
        compiler_params=pltpu.CompilerParams(
            dimension_semantics=("arbitrary",),   # sequential recurrence
        ),
    )(encoder_outputs.astype(f32), ua_enc, wa_t, va, w_h6, w_c6, b_big)

    # torch.cat(output, dim=0) of out_len tensors of (B, 1, H)  ->  (out_len*B, 1, H)
    return outputs.reshape(out_len * B, 1, H), attn


def init_params(key, hidden_size):
    """Deterministic synthetic init, PyTorch parameter layout (rows ordered r, z, n)."""
    H = hidden_size
    ks = jax.random.split(key, 7)
    bound = 1.0 / np.sqrt(H)
    u = lambda k, shape: jax.random.uniform(k, shape, jnp.float32, -bound, bound)
    return {
        "wa_weight": u(ks[0], (H, H)),          # nn.Linear(H, H, bias=False).weight
        "ua_weight": u(ks[1], (H, H)),
        "va": jax.random.normal(ks[2], (H,), jnp.float32),
        "weight_ih": u(ks[3], (3 * H, 2 * H)),  # GRU weight_ih_l0
        "weight_hh": u(ks[4], (3 * H, H)),      # GRU weight_hh_l0
        "bias_ih": u(ks[5], (3 * H,)),
        "bias_hh": u(ks[6], (3 * H,)),
    }


def reference_forward(encoder_outputs, p, out_len):
    """Pure-JAX reference mirroring the PyTorch forward (for verification)."""
    B, T, H = encoder_outputs.shape
    hidden = jnp.zeros((B, H), jnp.float32)
    inp = jnp.zeros((B, H), jnp.float32)
    wa_t = p["wa_weight"].T
    ua_enc = jnp.einsum("bth,hk->btk", encoder_outputs, p["ua_weight"].T)
    outs = []
    attn = None
    for _ in range(out_len):
        wa_h = hidden @ wa_t
        energy = jnp.tanh(wa_h[:, None, :] + ua_enc)
        scores = jnp.einsum("bth,h->bt", energy, p["va"])
        attn = jax.nn.softmax(scores, axis=-1)
        context = jnp.einsum("bt,bth->bh", attn, encoder_outputs)
        x = jnp.concatenate([inp, context], axis=-1)
        gi = x @ p["weight_ih"].T + p["bias_ih"]          # (B, 3H), cols [r, z, n]
        gh = hidden @ p["weight_hh"].T + p["bias_hh"]     # (B, 3H)
        r = jax.nn.sigmoid(gi[:, :H] + gh[:, :H])
        z = jax.nn.sigmoid(gi[:, H:2 * H] + gh[:, H:2 * H])
        n = jnp.tanh(gi[:, 2 * H:] + r * gh[:, 2 * H:])
        hidden = (1.0 - z) * n + z * hidden
        inp = hidden                                      # input = temp.detach()
        outs.append(hidden)
    out = jnp.stack(outs, axis=0).reshape(out_len * B, 1, H)
    return out, attn


if __name__ == "__main__":
    B, T, H = 2, 8, 32        # batch, max_time, output_size (== hidden_size)
    out_len = 4

    key = jax.random.PRNGKey(0)
    k_enc, k_par = jax.random.split(key)
    encoder_outputs = jax.random.normal(k_enc, (B, T, H), jnp.float32)
    params = init_params(k_par, H)

    out, attn = attention_decoder_forward(encoder_outputs, params, out_len)
    out = jax.block_until_ready(out)
    attn = jax.block_until_ready(attn)

    ref_out, ref_attn = reference_forward(encoder_outputs, params, out_len)

    assert out.shape == (out_len * B, 1, H)
    assert attn.shape == (B, T)
    np.testing.assert_allclose(np.asarray(out), np.asarray(ref_out), rtol=1e-3, atol=1e-3)
    np.testing.assert_allclose(np.asarray(attn), np.asarray(ref_attn), rtol=1e-3, atol=1e-3)

    print("KERNEL_OK")
</pallas_src>

<mosaic_0001>
module attributes {stable_mosaic.version = 11 : i64} {
  func.func @_attn_decoder_kernel(%arg0: i32, %arg1: memref<2x8x32xf32, #tpu.memory_space<vmem>>, %arg2: memref<2x8x32xf32, #tpu.memory_space<vmem>>, %arg3: memref<32x32xf32, #tpu.memory_space<vmem>>, %arg4: memref<1x1x32xf32, #tpu.memory_space<vmem>>, %arg5: memref<32x192xf32, #tpu.memory_space<vmem>>, %arg6: memref<32x192xf32, #tpu.memory_space<vmem>>, %arg7: memref<1x192xf32, #tpu.memory_space<vmem>>, %arg8: memref<4x2x32xf32, #tpu.memory_space<vmem>>, %arg9: memref<2x8xf32, #tpu.memory_space<vmem>>) attributes {dimension_semantics = [#tpu.dimension_semantics<arbitrary>], iteration_bounds = array<i64: 1>, scalar_prefetch = 0 : i64, scratch_operands = 0 : i64, tpu.core_type = #tpu.core_type<tc>, window_params = [{pipeline_mode = #tpu.pipeline_mode<synchronous>, transform_indices = @transform_0, window_bounds = array<i64: 2, 8, 32>}, {pipeline_mode = #tpu.pipeline_mode<synchronous>, transform_indices = @transform_1, window_bounds = array<i64: 2, 8, 32>}, {pipeline_mode = #tpu.pipeline_mode<synchronous>, transform_indices = @transform_2, window_bounds = array<i64: 32, 32>}, {pipeline_mode = #tpu.pipeline_mode<synchronous>, transform_indices = @transform_3, window_bounds = array<i64: 1, 1, 32>}, {pipeline_mode = #tpu.pipeline_mode<synchronous>, transform_indices = @transform_4, window_bounds = array<i64: 32, 192>}, {pipeline_mode = #tpu.pipeline_mode<synchronous>, transform_indices = @transform_5, window_bounds = array<i64: 32, 192>}, {pipeline_mode = #tpu.pipeline_mode<synchronous>, transform_indices = @transform_6, window_bounds = array<i64: 1, 192>}, {pipeline_mode = #tpu.pipeline_mode<synchronous>, transform_indices = @transform_7, window_bounds = array<i64: 4, 2, 32>}, {pipeline_mode = #tpu.pipeline_mode<synchronous>, transform_indices = @transform_8, window_bounds = array<i64: 2, 8>}]} {
    %c0 = arith.constant 0 : index
    %c0_0 = arith.constant 0 : index
    %c0_1 = arith.constant 0 : index
    %0 = vector.load %arg1[%c0, %c0_0, %c0_1] : memref<2x8x32xf32, #tpu.memory_space<vmem>>, vector<2x8x32xf32>
    %c0_2 = arith.constant 0 : index
    %c0_3 = arith.constant 0 : index
    %c0_4 = arith.constant 0 : index
    %1 = vector.load %arg2[%c0_2, %c0_3, %c0_4] : memref<2x8x32xf32, #tpu.memory_space<vmem>>, vector<2x8x32xf32>
    %c0_5 = arith.constant 0 : index
    %c0_6 = arith.constant 0 : index
    %2 = vector.load %arg3[%c0_5, %c0_6] : memref<32x32xf32, #tpu.memory_space<vmem>>, vector<32x32xf32>
    %c0_7 = arith.constant 0 : index
    %c0_8 = arith.constant 0 : index
    %c0_9 = arith.constant 0 : index
    %3 = vector.load %arg4[%c0_7, %c0_8, %c0_9] : memref<1x1x32xf32, #tpu.memory_space<vmem>>, vector<1x1x32xf32>
    %4 = vector.shape_cast %3 : vector<1x1x32xf32> to vector<1x1x32xf32>
    %5 = vector.broadcast %4 : vector<1x1x32xf32> to vector<2x8x32xf32>
    %c0_10 = arith.constant 0 : index
    %c0_11 = arith.constant 0 : index
    %6 = vector.load %arg5[%c0_10, %c0_11] : memref<32x192xf32, #tpu.memory_space<vmem>>, vector<32x192xf32>
    %c0_12 = arith.constant 0 : index
    %c0_13 = arith.constant 0 : index
    %7 = vector.load %arg6[%c0_12, %c0_13] : memref<32x192xf32, #tpu.memory_space<vmem>>, vector<32x192xf32>
    %c0_14 = arith.constant 0 : index
    %c0_15 = arith.constant 0 : index
    %8 = vector.load %arg7[%c0_14, %c0_15] : memref<1x192xf32, #tpu.memory_space<vmem>>, vector<1x192xf32>
    %9 = vector.shape_cast %8 : vector<1x192xf32> to vector<1x192xf32>
    %10 = vector.broadcast %9 : vector<1x192xf32> to vector<2x192xf32>
    %cst = arith.constant 0.000000e+00 : f32
    %11 = vector.broadcast %cst : f32 to vector<2x32xf32>
    %c0_i32 = arith.constant 0 : i32
    %cst_16 = arith.constant dense<0.000000e+00> : vector<2x32xf32>
    %12 = tpu.matmul %11, %2, %cst_16 {dimension_numbers = #tpu.dot_dimension_numbers<[1], [0], [0], [1], [0, 0, 1, 1], [], []>} : vector<2x32xf32>, vector<32x32xf32>, vector<2x32xf32> -> vector<2x32xf32>
    %13 = vector.shape_cast %12 : vector<2x32xf32> to vector<2x1x32xf32>
    %14 = vector.broadcast %13 : vector<2x1x32xf32> to vector<2x8x32xf32>
    %15 = arith.addf %14, %1 : vector<2x8x32xf32>
    %16 = math.tanh %15 : vector<2x8x32xf32>
    %17 = arith.mulf %16, %5 : vector<2x8x32xf32>
    %cst_17 = arith.constant dense<0.000000e+00> : vector<2x8xf32>
    %18 = vector.multi_reduction <add>, %17, %cst_17 [2] : vector<2x8x32xf32> to vector<2x8xf32>
    %cst_18 = arith.constant dense<0xFF800000> : vector<2xf32>
    %19 = vector.multi_reduction <maximumf>, %18, %cst_18 [1] : vector<2x8xf32> to vector<2xf32>
    %20 = vector.shape_cast %19 : vector<2xf32> to vector<2x1xf32>
    %21 = vector.broadcast %20 : vector<2x1xf32> to vector<2x8xf32>
    %22 = arith.subf %18, %21 : vector<2x8xf32>
    %23 = math.exp %22 : vector<2x8xf32>
    %cst_19 = arith.constant dense<0.000000e+00> : vector<2xf32>
    %24 = vector.multi_reduction <add>, %23, %cst_19 [1] : vector<2x8xf32> to vector<2xf32>
    %25 = vector.shape_cast %24 : vector<2xf32> to vector<2x1xf32>
    %26 = tpu.reciprocal %25 : vector<2x1xf32> -> vector<2x1xf32>
    %27 = vector.broadcast %26 : vector<2x1xf32> to vector<2x8xf32>
    %28 = arith.mulf %23, %27 : vector<2x8xf32>
    %29 = vector.shape_cast %28 : vector<2x8xf32> to vector<2x1x8xf32>
    "tpu.trace_start"() <{level = 10 : i32, message = "bqt,bth->bqh"}> : () -> ()
    %cst_20 = arith.constant dense<0.000000e+00> : vector<2x1x32xf32>
    %30 = tpu.matmul %29, %0, %cst_20 {dimension_numbers = #tpu.dot_dimension_numbers<[2], [1], [1], [2], [0, 0, 0, 1, 1, 2], [0], [0]>} : vector<2x1x8xf32>, vector<2x8x32xf32>, vector<2x1x32xf32> -> vector<2x1x32xf32>
    "tpu.trace_stop"() : () -> ()
    %31 = vector.shape_cast %30 : vector<2x1x32xf32> to vector<2x32xf32>
    %cst_21 = arith.constant dense<0.000000e+00> : vector<2x192xf32>
    %32 = tpu.matmul %11, %6, %cst_21 {dimension_numbers = #tpu.dot_dimension_numbers<[1], [0], [0], [1], [0, 0, 1, 1], [], []>} : vector<2x32xf32>, vector<32x192xf32>, vector<2x192xf32> -> vector<2x192xf32>
    %cst_22 = arith.constant dense<0.000000e+00> : vector<2x192xf32>
    %33 = tpu.matmul %31, %7, %cst_22 {dimension_numbers = #tpu.dot_dimension_numbers<[1], [0], [0], [1], [0, 0, 1, 1], [], []>} : vector<2x32xf32>, vector<32x192xf32>, vector<2x192xf32> -> vector<2x192xf32>
    %34 = arith.addf %32, %33 : vector<2x192xf32>
    %35 = arith.addf %34, %10 : vector<2x192xf32>
    %36 = vector.extract_strided_slice %35 {offsets = [0, 0], sizes = [2, 32], strides = [1, 1]} : vector<2x192xf32> to vector<2x32xf32>
    %37 = vector.extract_strided_slice %35 {offsets = [0, 32], sizes = [2, 32], strides = [1, 1]} : vector<2x192xf32> to vector<2x32xf32>
    %38 = vector.extract_strided_slice %35 {offsets = [0, 64], sizes = [2, 32], strides = [1, 1]} : vector<2x192xf32> to vector<2x32xf32>
    %39 = vector.extract_strided_slice %35 {offsets = [0, 96], sizes = [2, 32], strides = [1, 1]} : vector<2x192xf32> to vector<2x32xf32>
    %40 = vector.extract_strided_slice %35 {offsets = [0, 128], sizes = [2, 32], strides = [1, 1]} : vector<2x192xf32> to vector<2x32xf32>
    %41 = vector.extract_strided_slice %35 {offsets = [0, 160], sizes = [2, 32], strides = [1, 1]} : vector<2x192xf32> to vector<2x32xf32>
    %42 = arith.addf %36, %39 : vector<2x32xf32>
    %43 = arith.negf %42 : vector<2x32xf32>
    %44 = math.exp %43 : vector<2x32xf32>
    %cst_23 = arith.constant 1.000000e+00 : f32
    %45 = vector.broadcast %cst_23 : f32 to vector<2x32xf32>
    %46 = arith.addf %45, %44 : vector<2x32xf32>
    %47 = arith.divf %45, %46 : vector<2x32xf32>
    %48 = arith.addf %37, %40 : vector<2x32xf32>
    %49 = arith.negf %48 : vector<2x32xf32>
    %50 = math.exp %49 : vector<2x32xf32>
    %cst_24 = arith.constant 1.000000e+00 : f32
    %51 = vector.broadcast %cst_24 : f32 to vector<2x32xf32>
    %52 = arith.addf %51, %50 : vector<2x32xf32>
    %53 = arith.divf %51, %52 : vector<2x32xf32>
    %54 = arith.mulf %47, %41 : vector<2x32xf32>
    %55 = arith.addf %38, %54 : vector<2x32xf32>
    %56 = math.tanh %55 : vector<2x32xf32>
    %cst_25 = arith.constant 1.000000e+00 : f32
    %57 = vector.broadcast %cst_25 : f32 to vector<2x32xf32>
    %58 = arith.subf %57, %53 : vector<2x32xf32>
    %59 = arith.mulf %58, %56 : vector<2x32xf32>
    %60 = arith.mulf %53, %11 : vector<2x32xf32>
    %61 = arith.addf %59, %60 : vector<2x32xf32>
    %62 = arith.index_cast %c0_i32 : i32 to index
    %c0_26 = arith.constant 0 : index
    %c0_27 = arith.constant 0 : index
    %63 = vector.load %arg8[%62, %c0_26, %c0_27] : memref<4x2x32xf32, #tpu.memory_space<vmem>>, vector<1x2x32xf32>
    %64 = vector.shape_cast %63 : vector<1x2x32xf32> to vector<2x32xf32>
    %65 = vector.shape_cast %61 : vector<2x32xf32> to vector<1x2x32xf32>
    tpu.vector_store %arg8[%62, %c0_26, %c0_27], %65 {strides = array<i32>} : memref<4x2x32xf32, #tpu.memory_space<vmem>>, vector<1x2x32xf32>,
    %c0_28 = arith.constant 0 : index
    %c0_29 = arith.constant 0 : index
    %66 = vector.load %arg9[%c0_28, %c0_29] : memref<2x8xf32, #tpu.memory_space<vmem>>, vector<2x8xf32>
    tpu.vector_store %arg9[%c0_28, %c0_29], %28 {strides = array<i32>} : memref<2x8xf32, #tpu.memory_space<vmem>>, vector<2x8xf32>,
    %c1_i32 = arith.constant 1 : i32
    %cst_30 = arith.constant dense<0.000000e+00> : vector<2x32xf32>
    %67 = tpu.matmul %61, %2, %cst_30 {dimension_numbers = #tpu.dot_dimension_numbers<[1], [0], [0], [1], [0, 0, 1, 1], [], []>} : vector<2x32xf32>, vector<32x32xf32>, vector<2x32xf32> -> vector<2x32xf32>
    %68 = vector.shape_cast %67 : vector<2x32xf32> to vector<2x1x32xf32>
    %69 = vector.broadcast %68 : vector<2x1x32xf32> to vector<2x8x32xf32>
    %70 = arith.addf %69, %1 : vector<2x8x32xf32>
    %71 = math.tanh %70 : vector<2x8x32xf32>
    %72 = arith.mulf %71, %5 : vector<2x8x32xf32>
    %cst_31 = arith.constant dense<0.000000e+00> : vector<2x8xf32>
    %73 = vector.multi_reduction <add>, %72, %cst_31 [2] : vector<2x8x32xf32> to vector<2x8xf32>
    %cst_32 = arith.constant dense<0xFF800000> : vector<2xf32>
    %74 = vector.multi_reduction <maximumf>, %73, %cst_32 [1] : vector<2x8xf32> to vector<2xf32>
    %75 = vector.shape_cast %74 : vector<2xf32> to vector<2x1xf32>
    %76 = vector.broadcast %75 : vector<2x1xf32> to vector<2x8xf32>
    %77 = arith.subf %73, %76 : vector<2x8xf32>
    %78 = math.exp %77 : vector<2x8xf32>
    %cst_33 = arith.constant dense<0.000000e+00> : vector<2xf32>
    %79 = vector.multi_reduction <add>, %78, %cst_33 [1] : vector<2x8xf32> to vector<2xf32>
    %80 = vector.shape_cast %79 : vector<2xf32> to vector<2x1xf32>
    %81 = tpu.reciprocal %80 : vector<2x1xf32> -> vector<2x1xf32>
    %82 = vector.broadcast %81 : vector<2x1xf32> to vector<2x8xf32>
    %83 = arith.mulf %78, %82 : vector<2x8xf32>
    %84 = vector.shape_cast %83 : vector<2x8xf32> to vector<2x1x8xf32>
    "tpu.trace_start"() <{level = 10 : i32, message = "bqt,bth->bqh"}> : () -> ()
    %cst_34 = arith.constant dense<0.000000e+00> : vector<2x1x32xf32>
    %85 = tpu.matmul %84, %0, %cst_34 {dimension_numbers = #tpu.dot_dimension_numbers<[2], [1], [1], [2], [0, 0, 0, 1, 1, 2], [0], [0]>} : vector<2x1x8xf32>, vector<2x8x32xf32>, vector<2x1x32xf32> -> vector<2x1x32xf32>
    "tpu.trace_stop"() : () -> ()
    %86 = vector.shape_cast %85 : vector<2x1x32xf32> to vector<2x32xf32>
    %cst_35 = arith.constant dense<0.000000e+00> : vector<2x192xf32>
    %87 = tpu.matmul %61, %6, %cst_35 {dimension_numbers = #tpu.dot_dimension_numbers<[1], [0], [0], [1], [0, 0, 1, 1], [], []>} : vector<2x32xf32>, vector<32x192xf32>, vector<2x192xf32> -> vector<2x192xf32>
    %cst_36 = arith.constant dense<0.000000e+00> : vector<2x192xf32>
    %88 = tpu.matmul %86, %7, %cst_36 {dimension_numbers = #tpu.dot_dimension_numbers<[1], [0], [0], [1], [0, 0, 1, 1], [], []>} : vector<2x32xf32>, vector<32x192xf32>, vector<2x192xf32> -> vector<2x192xf32>
    %89 = arith.addf %87, %88 : vector<2x192xf32>
    %90 = arith.addf %89, %10 : vector<2x192xf32>
    %91 = vector.extract_strided_slice %90 {offsets = [0, 0], sizes = [2, 32], strides = [1, 1]} : vector<2x192xf32> to vector<2x32xf32>
    %92 = vector.extract_strided_slice %90 {offsets = [0, 32], sizes = [2, 32], strides = [1, 1]} : vector<2x192xf32> to vector<2x32xf32>
    %93 = vector.extract_strided_slice %90 {offsets = [0, 64], sizes = [2, 32], strides = [1, 1]} : vector<2x192xf32> to vector<2x32xf32>
    %94 = vector.extract_strided_slice %90 {offsets = [0, 96], sizes = [2, 32], strides = [1, 1]} : vector<2x192xf32> to vector<2x32xf32>
    %95 = vector.extract_strided_slice %90 {offsets = [0, 128], sizes = [2, 32], strides = [1, 1]} : vector<2x192xf32> to vector<2x32xf32>
    %96 = vector.extract_strided_slice %90 {offsets = [0, 160], sizes = [2, 32], strides = [1, 1]} : vector<2x192xf32> to vector<2x32xf32>
    %97 = arith.addf %91, %94 : vector<2x32xf32>
    %98 = arith.negf %97 : vector<2x32xf32>
    %99 = math.exp %98 : vector<2x32xf32>
    %cst_37 = arith.constant 1.000000e+00 : f32
    %100 = vector.broadcast %cst_37 : f32 to vector<2x32xf32>
    %101 = arith.addf %100, %99 : vector<2x32xf32>
    %102 = arith.divf %100, %101 : vector<2x32xf32>
    %103 = arith.addf %92, %95 : vector<2x32xf32>
    %104 = arith.negf %103 : vector<2x32xf32>
    %105 = math.exp %104 : vector<2x32xf32>
    %cst_38 = arith.constant 1.000000e+00 : f32
    %106 = vector.broadcast %cst_38 : f32 to vector<2x32xf32>
    %107 = arith.addf %106, %105 : vector<2x32xf32>
    %108 = arith.divf %106, %107 : vector<2x32xf32>
    %109 = arith.mulf %102, %96 : vector<2x32xf32>
    %110 = arith.addf %93, %109 : vector<2x32xf32>
    %111 = math.tanh %110 : vector<2x32xf32>
    %cst_39 = arith.constant 1.000000e+00 : f32
    %112 = vector.broadcast %cst_39 : f32 to vector<2x32xf32>
    %113 = arith.subf %112, %108 : vector<2x32xf32>
    %114 = arith.mulf %113, %111 : vector<2x32xf32>
    %115 = arith.mulf %108, %61 : vector<2x32xf32>
    %116 = arith.addf %114, %115 : vector<2x32xf32>
    %117 = arith.index_cast %c1_i32 : i32 to index
    %c0_40 = arith.constant 0 : index
    %c0_41 = arith.constant 0 : index
    %118 = vector.load %arg8[%117, %c0_40, %c0_41] : memref<4x2x32xf32, #tpu.memory_space<vmem>>, vector<1x2x32xf32>
    %119 = vector.shape_cast %118 : vector<1x2x32xf32> to vector<2x32xf32>
    %120 = vector.shape_cast %116 : vector<2x32xf32> to vector<1x2x32xf32>
    tpu.vector_store %arg8[%117, %c0_40, %c0_41], %120 {strides = array<i32>} : memref<4x2x32xf32, #tpu.memory_space<vmem>>, vector<1x2x32xf32>,
    %c0_42 = arith.constant 0 : index
    %c0_43 = arith.constant 0 : index
    %121 = vector.load %arg9[%c0_42, %c0_43] : memref<2x8xf32, #tpu.memory_space<vmem>>, vector<2x8xf32>
    tpu.vector_store %arg9[%c0_42, %c0_43], %83 {strides = array<i32>} : memref<2x8xf32, #tpu.memory_space<vmem>>, vector<2x8xf32>,
    %c2_i32 = arith.constant 2 : i32
    %cst_44 = arith.constant dense<0.000000e+00> : vector<2x32xf32>
    %122 = tpu.matmul %116, %2, %cst_44 {dimension_numbers = #tpu.dot_dimension_numbers<[1], [0], [0], [1], [0, 0, 1, 1], [], []>} : vector<2x32xf32>, vector<32x32xf32>, vector<2x32xf32> -> vector<2x32xf32>
    %123 = vector.shape_cast %122 : vector<2x32xf32> to vector<2x1x32xf32>
    %124 = vector.broadcast %123 : vector<2x1x32xf32> to vector<2x8x32xf32>
    %125 = arith.addf %124, %1 : vector<2x8x32xf32>
    %126 = math.tanh %125 : vector<2x8x32xf32>
    %127 = arith.mulf %126, %5 : vector<2x8x32xf32>
    %cst_45 = arith.constant dense<0.000000e+00> : vector<2x8xf32>
    %128 = vector.multi_reduction <add>, %127, %cst_45 [2] : vector<2x8x32xf32> to vector<2x8xf32>
    %cst_46 = arith.constant dense<0xFF800000> : vector<2xf32>
    %129 = vector.multi_reduction <maximumf>, %128, %cst_46 [1] : vector<2x8xf32> to vector<2xf32>
    %130 = vector.shape_cast %129 : vector<2xf32> to vector<2x1xf32>
    %131 = vector.broadcast %130 : vector<2x1xf32> to vector<2x8xf32>
    %132 = arith.subf %128, %131 : vector<2x8xf32>
    %133 = math.exp %132 : vector<2x8xf32>
    %cst_47 = arith.constant dense<0.000000e+00> : vector<2xf32>
    %134 = vector.multi_reduction <add>, %133, %cst_47 [1] : vector<2x8xf32> to vector<2xf32>
    %135 = vector.shape_cast %134 : vector<2xf32> to vector<2x1xf32>
    %136 = tpu.reciprocal %135 : vector<2x1xf32> -> vector<2x1xf32>
    %137 = vector.broadcast %136 : vector<2x1xf32> to vector<2x8xf32>
    %138 = arith.mulf %133, %137 : vector<2x8xf32>
    %139 = vector.shape_cast %138 : vector<2x8xf32> to vector<2x1x8xf32>
    "tpu.trace_start"() <{level = 10 : i32, message = "bqt,bth->bqh"}> : () -> ()
    %cst_48 = arith.constant dense<0.000000e+00> : vector<2x1x32xf32>
    %140 = tpu.matmul %139, %0, %cst_48 {dimension_numbers = #tpu.dot_dimension_numbers<[2], [1], [1], [2], [0, 0, 0, 1, 1, 2], [0], [0]>} : vector<2x1x8xf32>, vector<2x8x32xf32>, vector<2x1x32xf32> -> vector<2x1x32xf32>
    "tpu.trace_stop"() : () -> ()
    %141 = vector.shape_cast %140 : vector<2x1x32xf32> to vector<2x32xf32>
    %cst_49 = arith.constant dense<0.000000e+00> : vector<2x192xf32>
    %142 = tpu.matmul %116, %6, %cst_49 {dimension_numbers = #tpu.dot_dimension_numbers<[1], [0], [0], [1], [0, 0, 1, 1], [], []>} : vector<2x32xf32>, vector<32x192xf32>, vector<2x192xf32> -> vector<2x192xf32>
    %cst_50 = arith.constant dense<0.000000e+00> : vector<2x192xf32>
    %143 = tpu.matmul %141, %7, %cst_50 {dimension_numbers = #tpu.dot_dimension_numbers<[1], [0], [0], [1], [0, 0, 1, 1], [], []>} : vector<2x32xf32>, vector<32x192xf32>, vector<2x192xf32> -> vector<2x192xf32>
    %144 = arith.addf %142, %143 : vector<2x192xf32>
    %145 = arith.addf %144, %10 : vector<2x192xf32>
    %146 = vector.extract_strided_slice %145 {offsets = [0, 0], sizes = [2, 32], strides = [1, 1]} : vector<2x192xf32> to vector<2x32xf32>
    %147 = vector.extract_strided_slice %145 {offsets = [0, 32], sizes = [2, 32], strides = [1, 1]} : vector<2x192xf32> to vector<2x32xf32>
    %148 = vector.extract_strided_slice %145 {offsets = [0, 64], sizes = [2, 32], strides = [1, 1]} : vector<2x192xf32> to vector<2x32xf32>
    %149 = vector.extract_strided_slice %145 {offsets = [0, 96], sizes = [2, 32], strides = [1, 1]} : vector<2x192xf32> to vector<2x32xf32>
    %150 = vector.extract_strided_slice %145 {offsets = [0, 128], sizes = [2, 32], strides = [1, 1]} : vector<2x192xf32> to vector<2x32xf32>
    %151 = vector.extract_strided_slice %145 {offsets = [0, 160], sizes = [2, 32], strides = [1, 1]} : vector<2x192xf32> to vector<2x32xf32>
    %152 = arith.addf %146, %149 : vector<2x32xf32>
    %153 = arith.negf %152 : vector<2x32xf32>
    %154 = math.exp %153 : vector<2x32xf32>
    %cst_51 = arith.constant 1.000000e+00 : f32
    %155 = vector.broadcast %cst_51 : f32 to vector<2x32xf32>
    %156 = arith.addf %155, %154 : vector<2x32xf32>
    %157 = arith.divf %155, %156 : vector<2x32xf32>
    %158 = arith.addf %147, %150 : vector<2x32xf32>
    %159 = arith.negf %158 : vector<2x32xf32>
    %160 = math.exp %159 : vector<2x32xf32>
    %cst_52 = arith.constant 1.000000e+00 : f32
    %161 = vector.broadcast %cst_52 : f32 to vector<2x32xf32>
    %162 = arith.addf %161, %160 : vector<2x32xf32>
    %163 = arith.divf %161, %162 : vector<2x32xf32>
    %164 = arith.mulf %157, %151 : vector<2x32xf32>
    %165 = arith.addf %148, %164 : vector<2x32xf32>
    %166 = math.tanh %165 : vector<2x32xf32>
    %cst_53 = arith.constant 1.000000e+00 : f32
    %167 = vector.broadcast %cst_53 : f32 to vector<2x32xf32>
    %168 = arith.subf %167, %163 : vector<2x32xf32>
    %169 = arith.mulf %168, %166 : vector<2x32xf32>
    %170 = arith.mulf %163, %116 : vector<2x32xf32>
    %171 = arith.addf %169, %170 : vector<2x32xf32>
    %172 = arith.index_cast %c2_i32 : i32 to index
    %c0_54 = arith.constant 0 : index
    %c0_55 = arith.constant 0 : index
    %173 = vector.load %arg8[%172, %c0_54, %c0_55] : memref<4x2x32xf32, #tpu.memory_space<vmem>>, vector<1x2x32xf32>
    %174 = vector.shape_cast %173 : vector<1x2x32xf32> to vector<2x32xf32>
    %175 = vector.shape_cast %171 : vector<2x32xf32> to vector<1x2x32xf32>
    tpu.vector_store %arg8[%172, %c0_54, %c0_55], %175 {strides = array<i32>} : memref<4x2x32xf32, #tpu.memory_space<vmem>>, vector<1x2x32xf32>,
    %c0_56 = arith.constant 0 : index
    %c0_57 = arith.constant 0 : index
    %176 = vector.load %arg9[%c0_56, %c0_57] : memref<2x8xf32, #tpu.memory_space<vmem>>, vector<2x8xf32>
    tpu.vector_store %arg9[%c0_56, %c0_57], %138 {strides = array<i32>} : memref<2x8xf32, #tpu.memory_space<vmem>>, vector<2x8xf32>,
    %c3_i32 = arith.constant 3 : i32
    %cst_58 = arith.constant dense<0.000000e+00> : vector<2x32xf32>
    %177 = tpu.matmul %171, %2, %cst_58 {dimension_numbers = #tpu.dot_dimension_numbers<[1], [0], [0], [1], [0, 0, 1, 1], [], []>} : vector<2x32xf32>, vector<32x32xf32>, vector<2x32xf32> -> vector<2x32xf32>
    %178 = vector.shape_cast %177 : vector<2x32xf32> to vector<2x1x32xf32>
    %179 = vector.broadcast %178 : vector<2x1x32xf32> to vector<2x8x32xf32>
    %180 = arith.addf %179, %1 : vector<2x8x32xf32>
    %181 = math.tanh %180 : vector<2x8x32xf32>
    %182 = arith.mulf %181, %5 : vector<2x8x32xf32>
    %cst_59 = arith.constant dense<0.000000e+00> : vector<2x8xf32>
    %183 = vector.multi_reduction <add>, %182, %cst_59 [2] : vector<2x8x32xf32> to vector<2x8xf32>
    %cst_60 = arith.constant dense<0xFF800000> : vector<2xf32>
    %184 = vector.multi_reduction <maximumf>, %183, %cst_60 [1] : vector<2x8xf32> to vector<2xf32>
    %185 = vector.shape_cast %184 : vector<2xf32> to vector<2x1xf32>
    %186 = vector.broadcast %185 : vector<2x1xf32> to vector<2x8xf32>
    %187 = arith.subf %183, %186 : vector<2x8xf32>
    %188 = math.exp %187 : vector<2x8xf32>
    %cst_61 = arith.constant dense<0.000000e+00> : vector<2xf32>
    %189 = vector.multi_reduction <add>, %188, %cst_61 [1] : vector<2x8xf32> to vector<2xf32>
    %190 = vector.shape_cast %189 : vector<2xf32> to vector<2x1xf32>
    %191 = tpu.reciprocal %190 : vector<2x1xf32> -> vector<2x1xf32>
    %192 = vector.broadcast %191 : vector<2x1xf32> to vector<2x8xf32>
    %193 = arith.mulf %188, %192 : vector<2x8xf32>
    %194 = vector.shape_cast %193 : vector<2x8xf32> to vector<2x1x8xf32>
    "tpu.trace_start"() <{level = 10 : i32, message = "bqt,bth->bqh"}> : () -> ()
    %cst_62 = arith.constant dense<0.000000e+00> : vector<2x1x32xf32>
    %195 = tpu.matmul %194, %0, %cst_62 {dimension_numbers = #tpu.dot_dimension_numbers<[2], [1], [1], [2], [0, 0, 0, 1, 1, 2], [0], [0]>} : vector<2x1x8xf32>, vector<2x8x32xf32>, vector<2x1x32xf32> -> vector<2x1x32xf32>
    "tpu.trace_stop"() : () -> ()
    %196 = vector.shape_cast %195 : vector<2x1x32xf32> to vector<2x32xf32>
    %cst_63 = arith.constant dense<0.000000e+00> : vector<2x192xf32>
    %197 = tpu.matmul %171, %6, %cst_63 {dimension_numbers = #tpu.dot_dimension_numbers<[1], [0], [0], [1], [0, 0, 1, 1], [], []>} : vector<2x32xf32>, vector<32x192xf32>, vector<2x192xf32> -> vector<2x192xf32>
    %cst_64 = arith.constant dense<0.000000e+00> : vector<2x192xf32>
    %198 = tpu.matmul %196, %7, %cst_64 {dimension_numbers = #tpu.dot_dimension_numbers<[1], [0], [0], [1], [0, 0, 1, 1], [], []>} : vector<2x32xf32>, vector<32x192xf32>, vector<2x192xf32> -> vector<2x192xf32>
    %199 = arith.addf %197, %198 : vector<2x192xf32>
    %200 = arith.addf %199, %10 : vector<2x192xf32>
    %201 = vector.extract_strided_slice %200 {offsets = [0, 0], sizes = [2, 32], strides = [1, 1]} : vector<2x192xf32> to vector<2x32xf32>
    %202 = vector.extract_strided_slice %200 {offsets = [0, 32], sizes = [2, 32], strides = [1, 1]} : vector<2x192xf32> to vector<2x32xf32>
    %203 = vector.extract_strided_slice %200 {offsets = [0, 64], sizes = [2, 32], strides = [1, 1]} : vector<2x192xf32> to vector<2x32xf32>
    %204 = vector.extract_strided_slice %200 {offsets = [0, 96], sizes = [2, 32], strides = [1, 1]} : vector<2x192xf32> to vector<2x32xf32>
    %205 = vector.extract_strided_slice %200 {offsets = [0, 128], sizes = [2, 32], strides = [1, 1]} : vector<2x192xf32> to vector<2x32xf32>
    %206 = vector.extract_strided_slice %200 {offsets = [0, 160], sizes = [2, 32], strides = [1, 1]} : vector<2x192xf32> to vector<2x32xf32>
    %207 = arith.addf %201, %204 : vector<2x32xf32>
    %208 = arith.negf %207 : vector<2x32xf32>
    %209 = math.exp %208 : vector<2x32xf32>
    %cst_65 = arith.constant 1.000000e+00 : f32
    %210 = vector.broadcast %cst_65 : f32 to vector<2x32xf32>
    %211 = arith.addf %210, %209 : vector<2x32xf32>
    %212 = arith.divf %210, %211 : vector<2x32xf32>
    %213 = arith.addf %202, %205 : vector<2x32xf32>
    %214 = arith.negf %213 : vector<2x32xf32>
    %215 = math.exp %214 : vector<2x32xf32>
    %cst_66 = arith.constant 1.000000e+00 : f32
    %216 = vector.broadcast %cst_66 : f32 to vector<2x32xf32>
    %217 = arith.addf %216, %215 : vector<2x32xf32>
    %218 = arith.divf %216, %217 : vector<2x32xf32>
    %219 = arith.mulf %212, %206 : vector<2x32xf32>
    %220 = arith.addf %203, %219 : vector<2x32xf32>
    %221 = math.tanh %220 : vector<2x32xf32>
    %cst_67 = arith.constant 1.000000e+00 : f32
    %222 = vector.broadcast %cst_67 : f32 to vector<2x32xf32>
    %223 = arith.subf %222, %218 : vector<2x32xf32>
    %224 = arith.mulf %223, %221 : vector<2x32xf32>
    %225 = arith.mulf %218, %171 : vector<2x32xf32>
    %226 = arith.addf %224, %225 : vector<2x32xf32>
    %227 = arith.index_cast %c3_i32 : i32 to index
    %c0_68 = arith.constant 0 : index
    %c0_69 = arith.constant 0 : index
    %228 = vector.load %arg8[%227, %c0_68, %c0_69] : memref<4x2x32xf32, #tpu.memory_space<vmem>>, vector<1x2x32xf32>
    %229 = vector.shape_cast %228 : vector<1x2x32xf32> to vector<2x32xf32>
    %230 = vector.shape_cast %226 : vector<2x32xf32> to vector<1x2x32xf32>
    tpu.vector_store %arg8[%227, %c0_68, %c0_69], %230 {strides = array<i32>} : memref<4x2x32xf32, #tpu.memory_space<vmem>>, vector<1x2x32xf32>,
    %c0_70 = arith.constant 0 : index
    %c0_71 = arith.constant 0 : index
    %231 = vector.load %arg9[%c0_70, %c0_71] : memref<2x8xf32, #tpu.memory_space<vmem>>, vector<2x8xf32>
    tpu.vector_store %arg9[%c0_70, %c0_71], %193 {strides = array<i32>} : memref<2x8xf32, #tpu.memory_space<vmem>>, vector<2x8xf32>,
    %c4_i32 = arith.constant 4 : i32
    return
  }
  func.func @transform_0(%arg0: i32) -> (i32, i32, i32) {
    %c0_i32 = arith.constant 0 : i32
    %c0_i32_0 = arith.constant 0 : i32
    %c0_i32_1 = arith.constant 0 : i32
    %c0_i32_2 = arith.constant 0 : i32
    return %c0_i32, %c0_i32_0, %c0_i32_1 : i32, i32, i32
  }
  func.func @transform_1(%arg0: i32) -> (i32, i32, i32) {
    %c0_i32 = arith.constant 0 : i32
    %c0_i32_0 = arith.constant 0 : i32
    %c0_i32_1 = arith.constant 0 : i32
    %c0_i32_2 = arith.constant 0 : i32
    return %c0_i32, %c0_i32_0, %c0_i32_1 : i32, i32, i32
  }
  func.func @transform_2(%arg0: i32) -> (i32, i32) {
    %c0_i32 = arith.constant 0 : i32
    %c0_i32_0 = arith.constant 0 : i32
    %c0_i32_1 = arith.constant 0 : i32
    return %c0_i32, %c0_i32_0 : i32, i32
  }
  func.func @transform_3(%arg0: i32) -> (i32, i32, i32) {
    %c0_i32 = arith.constant 0 : i32
    %c0_i32_0 = arith.constant 0 : i32
    %c0_i32_1 = arith.constant 0 : i32
    %c0_i32_2 = arith.constant 0 : i32
    return %c0_i32, %c0_i32_0, %c0_i32_1 : i32, i32, i32
  }
  func.func @transform_4(%arg0: i32) -> (i32, i32) {
    %c0_i32 = arith.constant 0 : i32
    %c0_i32_0 = arith.constant 0 : i32
    %c0_i32_1 = arith.constant 0 : i32
    return %c0_i32, %c0_i32_0 : i32, i32
  }
  func.func @transform_5(%arg0: i32) -> (i32, i32) {
    %c0_i32 = arith.constant 0 : i32
    %c0_i32_0 = arith.constant 0 : i32
    %c0_i32_1 = arith.constant 0 : i32
    return %c0_i32, %c0_i32_0 : i32, i32
  }
  func.func @transform_6(%arg0: i32) -> (i32, i32) {
    %c0_i32 = arith.constant 0 : i32
    %c0_i32_0 = arith.constant 0 : i32
    %c0_i32_1 = arith.constant 0 : i32
    return %c0_i32, %c0_i32_0 : i32, i32
  }
  func.func @transform_7(%arg0: i32) -> (i32, i32, i32) {
    %c0_i32 = arith.constant 0 : i32
    %c0_i32_0 = arith.constant 0 : i32
    %c0_i32_1 = arith.constant 0 : i32
    %c0_i32_2 = arith.constant 0 : i32
    return %c0_i32, %c0_i32_0, %c0_i32_1 : i32, i32, i32
  }
  func.func @transform_8(%arg0: i32) -> (i32, i32) {
    %c0_i32 = arith.constant 0 : i32
    %c0_i32_0 = arith.constant 0 : i32
    %c0_i32_1 = arith.constant 0 : i32
    return %c0_i32, %c0_i32_0 : i32, i32
  }
}

</mosaic_0001>

<llo_original>
// kernel: tpu_custom_call.1
$region0: #{tpu_custom_call.1}
  #allocation0 [shape = 'u32[]', space=smem, size = 0x4, offset = 0x4, fixed_abs, tag = 'smem constant byte address 0x4 - core index']
  #allocation1 [shape = 'u32[72,128]{1,0:T(1,128)}', space=vmem, size = 0x9000, scoped, tag = 'internal scratch']
  %s0 = inlined_call_operand.hbm [shape: f32[2,8,32], index: 0, kind: input, shape index: {}]
  %s1 = inlined_call_operand.hbm [shape: f32[2,8,32], index: 1, kind: input, shape index: {}]
  %s2 = inlined_call_operand.hbm [shape: f32[32,32], index: 2, kind: input, shape index: {}]
  %s3 = inlined_call_operand.vmem [shape: f32[1,1,32], index: 3, kind: input, shape index: {}]
  %s4 = inlined_call_operand.hbm [shape: f32[32,192], index: 4, kind: input, shape index: {}]
  %s5 = inlined_call_operand.hbm [shape: f32[32,192], index: 5, kind: input, shape index: {}]
  %s6 = inlined_call_operand.vmem [shape: f32[1,192], index: 6, kind: input, shape index: {}]
  %s7 = inlined_call_operand.hbm [shape: f32[4,2,32], index: 7, kind: output, shape index: {0}]
  %s8 = inlined_call_operand.hbm [shape: f32[2,8], index: 8, kind: output, shape index: {1}]
  %9 = xla_tuple %s7, %s8
  %s10 = sld [smem:[#allocation0]]
  $region66: #{tpu_custom_call.1} parent=0
    _
  %s12 = ssub.s32 1, %s10
  %s13 = scalar_select 0, %s12, %s10
  $region1: #{tpu_custom_call.1} parent=0
    #allocation2 [shape = 'u8[8192]{0}', space=vmem, size = 0x2000, scoped, tag = 'input window, operand 0, single buffered']
    #allocation3 [shape = 's32[1]{0}', space=sflag, size = 0x4, scoped, tag = 'scoped memory for tpu_custom_call.1']
    #allocation4 [shape = 's32[1]{0}', space=sflag, size = 0x4, scoped, tag = 'scoped memory for tpu_custom_call.1']
    #allocation5 [shape = 'u8[8192]{0}', space=vmem, size = 0x2000, scoped, tag = 'input window, operand 1, single buffered']
    #allocation6 [shape = 's32[1]{0}', space=sflag, size = 0x4, scoped, tag = 'scoped memory for tpu_custom_call.1']
    #allocation7 [shape = 'u8[16384]{0}', space=vmem, size = 0x4000, scoped, tag = 'input window, operand 2, single buffered']
    #allocation8 [shape = 'u8[32768]{0}', space=vmem, size = 0x8000, scoped, tag = 'input window, operand 4, single buffered']
    #allocation9 [shape = 's32[1]{0}', space=sflag, size = 0x4, scoped, tag = 'scoped memory for tpu_custom_call.1']
    #allocation10 [shape = 'u8[32768]{0}', space=vmem, size = 0x8000, scoped, tag = 'input window, operand 5, single buffered']
    #allocation11 [shape = 'u8[4096]{0}', space=vmem, size = 0x1000, scoped, tag = 'output window, operand 0, single buffered']
    #allocation12 [shape = 'u8[1024]{0}', space=vmem, size = 0x400, scoped, tag = 'output window, operand 1, single buffered']
    #allocation13 [shape = 's32[1]{0}', space=sflag, size = 0x4, scoped, tag = 'scoped memory for tpu_custom_call.1']
    %14 = vsyncpa [#allocation3], 0
    %15 = vsyncpa [#allocation6], 0
    %16 = vsyncpa [#allocation9], 0
    %17 = vsyncpa [#allocation4], 0
    %18 = vsyncpa [#allocation13], 0
    // Predicated region
    $region2: #{tpu_custom_call.1} parent=1 // pred_check
      _
    $region3: #{tpu_custom_call.1} parent=1 // pred_check_branch
      %20 = sbr.rel (0) target = $region5
    $region4: #{tpu_custom_call.1} parent=1 // pred_region
      %22 = vsyncadd [#allocation3], 0
      %s23 = sshll.u32 %s0, 4
      %s24 = int_to_ptr.hbm [resolvable:$true] %s23
      %s25 = sshll.u32 [#allocation2], 4
      %s26 = int_to_ptr.vmem [resolvable:$true] %s25
      %31 = dma.hbm_to_vmem [thread:$0]  %s24, 256, %s26, [#allocation3], 128, 128, 8
    $region5: #{tpu_custom_call.1} parent=1 // pred_fallthru
      _
    // Predicated region
    $region6: #{tpu_custom_call.1} parent=1 // pred_check
      _
    $region7: #{tpu_custom_call.1} parent=1 // pred_check_branch
      %33 = sbr.rel (0) target = $region9
    $region8: #{tpu_custom_call.1} parent=1 // pred_region
      %35 = vsyncadd [#allocation6], 0
      %s36 = sshll.u32 %s1, 4
      %s37 = int_to_ptr.hbm [resolvable:$true] %s36
      %s38 = sshll.u32 [#allocation5], 4
      %s39 = int_to_ptr.vmem [resolvable:$true] %s38
      %44 = dma.hbm_to_vmem [thread:$0]  %s37, 256, %s39, [#allocation6], 128, 128, 8
    $region9: #{tpu_custom_call.1} parent=1 // pred_fallthru
      _
    // Predicated region
    $region10: #{tpu_custom_call.1} parent=1 // pred_check
      _
    $region11: #{tpu_custom_call.1} parent=1 // pred_check_branch
      %46 = sbr.rel (0) target = $region13
    $region12: #{tpu_custom_call.1} parent=1 // pred_region
      %48 = vsyncadd [#allocation6], 0
      %s49 = sshll.u32 %s2, 4
      %s50 = int_to_ptr.hbm [resolvable:$true] %s49
      %s51 = sshll.u32 [#allocation7], 4
      %s52 = int_to_ptr.vmem [resolvable:$true] %s51
      %57 = dma.hbm_to_vmem [thread:$0]  %s50, 512, %s52, [#allocation6], 128, 128, 8
    $region13: #{tpu_custom_call.1} parent=1 // pred_fallthru
      _
    // Predicated region
    $region14: #{tpu_custom_call.1} parent=1 // pred_check
      _
    $region15: #{tpu_custom_call.1} parent=1 // pred_check_branch
      %59 = sbr.rel (0) target = $region17
    $region16: #{tpu_custom_call.1} parent=1 // pred_region
      _
    $region17: #{tpu_custom_call.1} parent=1 // pred_fallthru
      _
    // Predicated region
    $region18: #{tpu_custom_call.1} parent=1 // pred_check
      _
    $region19: #{tpu_custom_call.1} parent=1 // pred_check_branch
      %61 = sbr.rel (0) target = $region21
    $region20: #{tpu_custom_call.1} parent=1 // pred_region
      %63 = vsyncadd [#allocation9], 0
      %s64 = sshll.u32 %s4, 4
      %s65 = int_to_ptr.hbm [resolvable:$true] %s64
      %s66 = sshll.u32 [#allocation8], 4
      %s67 = int_to_ptr.vmem [resolvable:$true] %s66
      %72 = dma.hbm_to_vmem [thread:$0]  %s65, 1024, %s67, [#allocation9], 256, 256, 16
    $region21: #{tpu_custom_call.1} parent=1 // pred_fallthru
      _
    // Predicated region
    $region22: #{tpu_custom_call.1} parent=1 // pred_check
      _
    $region23: #{tpu_custom_call.1} parent=1 // pred_check_branch
      %74 = sbr.rel (0) target = $region25
    $region24: #{tpu_custom_call.1} parent=1 // pred_region
      %76 = vsyncadd [#allocation9], 0
      %s77 = sshll.u32 %s5, 4
      %s78 = int_to_ptr.hbm [resolvable:$true] %s77
      %s79 = sshll.u32 [#allocation10], 4
      %s80 = int_to_ptr.vmem [resolvable:$true] %s79
      %85 = dma.hbm_to_vmem [thread:$0]  %s78, 1024, %s80, [#allocation9], 256, 256, 16
    $region25: #{tpu_custom_call.1} parent=1 // pred_fallthru
      _
    // Predicated region
    $region26: #{tpu_custom_call.1} parent=1 // pred_check
      _
    $region27: #{tpu_custom_call.1} parent=1 // pred_check_branch
      %87 = sbr.rel (0) target = $region29
    $region28: #{tpu_custom_call.1} parent=1 // pred_region
      _
    $region29: #{tpu_custom_call.1} parent=1 // pred_fallthru
      _
    // Predicated region
    $region30: #{tpu_custom_call.1} parent=1 // pred_check
      _
    $region31: #{tpu_custom_call.1} parent=1 // pred_check_branch
      %89 = sbr.rel (0) target = $region33
    $region32: #{tpu_custom_call.1} parent=1 // pred_region
      %91 = dma.done [#allocation3], 256
    $region33: #{tpu_custom_call.1} parent=1 // pred_fallthru
      _
    // Predicated region
    $region34: #{tpu_custom_call.1} parent=1 // pred_check
      _
    $region35: #{tpu_custom_call.1} parent=1 // pred_check_branch
      %93 = sbr.rel (0) target = $region37
    $region36: #{tpu_custom_call.1} parent=1 // pred_region
      %95 = dma.done [#allocation6], 256
    $region37: #{tpu_custom_call.1} parent=1 // pred_fallthru
      _
    // Predicated region
    $region38: #{tpu_custom_call.1} parent=1 // pred_check
      _
    $region39: #{tpu_custom_call.1} parent=1 // pred_check_branch
      %97 = sbr.rel (0) target = $region41
    $region40: #{tpu_custom_call.1} parent=1 // pred_region
      %99 = dma.done [#allocation6], 512
    $region41: #{tpu_custom_call.1} parent=1 // pred_fallthru
      _
    // Predicated region
    $region42: #{tpu_custom_call.1} parent=1 // pred_check
      _
    $region43: #{tpu_custom_call.1} parent=1 // pred_check_branch
      %101 = sbr.rel (0) target = $region45
    $region44: #{tpu_custom_call.1} parent=1 // pred_region
      %103 = dma.done [#allocation9], 1024
    $region45: #{tpu_custom_call.1} parent=1 // pred_fallthru
      _
    // Predicated region
    $region46: #{tpu_custom_call.1} parent=1 // pred_check
      _
    $region47: #{tpu_custom_call.1} parent=1 // pred_check_branch
      %105 = sbr.rel (0) target = $region49
    $region48: #{tpu_custom_call.1} parent=1 // pred_region
      %107 = dma.done [#allocation9], 1024
    $region49: #{tpu_custom_call.1} parent=1 // pred_fallthru
      _
    %v108 = vld [vmem:[#allocation2] sm:$0xff]
    %v109 = vld [vmem:[#allocation2 + $0x8] sm:$0xff]
    %v110 = vld [vmem:[#allocation5] sm:$0xff]
    %v111 = vld [vmem:[#allocation5 + $0x8] sm:$0xff]
    %v112 = vld [vmem:[#allocation7] sm:$0xff]
    %v113 = vld [vmem:[#allocation7 + $0x8] sm:$0xff]
    %v114 = vld [vmem:[#allocation7 + $0x10] sm:$0xff]
    %v115 = vld [vmem:[#allocation7 + $0x18] sm:$0xff]
    %v116 = vld [vmem:[%s3] sm:$0x1]
    %v118 = vperm.slane %v116, 0
    %v120 = vld [vmem:[#allocation8] sm:$0xff]
    %v121 = vld [vmem:[#allocation8 + $0x8] sm:$0xff]
    %v122 = vld [vmem:[#allocation8 + $0x10] sm:$0xff]
    %v123 = vld [vmem:[#allocation8 + $0x18] sm:$0xff]
    %v124 = vld [vmem:[#allocation8 + $0x20] sm:$0xff]
    %v125 = vld [vmem:[#allocation8 + $0x28] sm:$0xff]
    %v126 = vld [vmem:[#allocation8 + $0x30] sm:$0xff]
    %v127 = vld [vmem:[#allocation8 + $0x38] sm:$0xff]
    %v128 = vld [vmem:[#allocation10] sm:$0xff]
    %v129 = vld [vmem:[#allocation10 + $0x8] sm:$0xff]
    %v130 = vld [vmem:[#allocation10 + $0x10] sm:$0xff]
    %v131 = vld [vmem:[#allocation10 + $0x18] sm:$0xff]
    %v132 = vld [vmem:[#allocation10 + $0x20] sm:$0xff]
    %v133 = vld [vmem:[#allocation10 + $0x28] sm:$0xff]
    %v134 = vld [vmem:[#allocation10 + $0x30] sm:$0xff]
    %v135 = vld [vmem:[#allocation10 + $0x38] sm:$0xff]
    %v136 = vld [vmem:[%s6] sm:$0x3]
    %v138 = vperm.slane %v136, 0
    %v139 = vperm.slane %v136, 1
    %vm142 = vcmask 261120
    %v144 = vsel %vm142, 0.0, 0
    %146 = vmatpush.msra.mxu0 0.0
    %147 = vmatpush.msra.mxu0 0.0
    %148 = vmatpush.msra.mxu0 0.0
    %149 = vmatpush.msra.mxu0 0.0
    %150 = vmatpush.msra.mxu0 0.0
    %151 = vmatpush.msra.mxu0 0.0
    %152 = vmatpush.msra.mxu0 0.0
    %153 = vmatpush.msra.mxu0 0.0
    %154 = vmatpush.msra.mxu0 0.0
    %155 = vmatpush.msra.mxu0 0.0
    %156 = vmatpush.msra.mxu0 0.0
    %157 = vmatpush.msra.mxu0 0.0
    %158 = vmatpush.msra.mxu0 %v115
    %159 = vmatpush.msra.mxu0 %v114
    %160 = vmatpush.msra.mxu0 %v113
    %161 = vmatpush.msra.mxu0 %v112
    %162 = vmatmul.f32.gmra.mxu0 %v144
    %v163 = vpop.f32.mrf.mxu0
    %v164 = vadd.f32 0.0, %v163
    %165 = vdwg.mxu0
    %v167 = vrot.slane %v164, 1
    %v168 = vperm.slane %v164, 0
    %v169 = vperm.slane %v167, 0
    %v172 = vadd.f32 %v168, %v110
    %v173 = vadd.f32 %v169, %v111
    %v174 = vtanh.pop %v172
    %v175 = vtanh.pop %v173
    %v176 = vmul.f32 %v174, %v118
    %v177 = vmul.f32 %v175, %v118
    %v178 = vsel %vm142, %v176, 0.0
    %179 = vadd.xlane.f32.xlu0 %v178
    %v180 = vpop.xlane.xlu0 %179
    %v181 = vsel %vm142, %v177, 0.0
    %182 = vadd.xlane.f32.xlu0 %v181
    %v183 = vpop.xlane.xlu0 %182
    %v186 = vlaneseq
    %v187 = vand.u32 %v186, 127
    %v188 = vperm.slane %v180, %v187
    %v189 = vperm.slane %v183, %v187
    %vm190 = vcmask 1041409
    %v191 = vsel %vm190, %v189, %v188
    %vm193 = vcmask 58368
    %v194 = vsel %vm193, %v191, -inf
    %195 = vmax.xlane.f32.xlu0 %v194
    %v196 = vpop.xlane.xlu0 %195
    %v198 = vperm.slane %v196, 0
    %v199 = vperm.slane %v196, 1
    %v202 = vsub.f32 %v180, %v198
    %v203 = vsub.f32 %v183, %v199
    %v204 = vmul.f32 %v202, 1.442695
    %v205 = vpow.pop %v204
    %v206 = vmul.f32 %v203, 1.442695
    %v207 = vpow.pop %v206
    %210 = vset.pattern.permute.xlu0 0
    %211 = vperm.xlu0 %210, %v205
    %v212 = vpop.permute.xlu0 %211
    %213 = vset.pattern.permute.xlu0 0
    %214 = vperm.xlu0 %213, %v207
    %v215 = vpop.permute.xlu0 %214
    %v216 = vperm.slane %v212, %v187
    %v217 = vperm.slane %v215, %v187
    %v218 = vsel %vm190, %v217, %v216
    %v220 = vsel %vm193, %v218, 0.0
    %221 = vadd.xlane.f32.xlu0 %v220
    %v222 = vpop.xlane.xlu0 %221
    %v223 = vrcp.pop %v222
    %v224 = vmul.f32 %v222, %v223
    %v225 = vsub.f32 1.0, %v224
    %v226 = vmul.f32 %v223, %v225
    %v227 = vadd.f32 %v223, %v226
    %vm228 = vweird.f32 %v222
    %vm229 = vweird.f32 %v223
    %vm230 = vmor %vm228, %vm229
    %v231 = vsel %vm230, %v223, %v227
    %v232 = vand.u32 2147483647, %v222
    %vm233 = vcmp.eq.f32.partialorder %v232, 8.507059e+37
    %v234 = vand.u32 %v222, 2147483648
    %v235 = vor.u32 1.1754944e-38, %v234
    %v236 = vsel %vm233, %v235, %v231
    %v238 = vperm.slane %v236, 0
    %v239 = vperm.slane %v236, 1
    %v242 = vmul.f32 %v205, %v238
    %v243 = vmul.f32 %v207, %v239
    %245 = vset.pattern.permute.xlu0 0
    %246 = vperm.xlu0 %245, %v242
    %v247 = vpop.permute.xlu0 %246
    %v248 = vperm.slane %v247, %v187
    %vm249 = vcmask 64512
    %v250 = vsel %vm249, %v248, 0
    %252 = vmatpush.msra.mxu0 0.0
    %253 = vmatpush.msra.mxu0 0.0
    %254 = vmatpush.msra.mxu0 0.0
    %255 = vmatpush.msra.mxu0 0.0
    %256 = vmatpush.msra.mxu0 0.0
    %257 = vmatpush.msra.mxu0 0.0
    %258 = vmatpush.msra.mxu0 0.0
    %259 = vmatpush.msra.mxu0 0.0
    %260 = vmatpush.msra.mxu0 0.0
    %261 = vmatpush.msra.mxu0 0.0
    %262 = vmatpush.msra.mxu0 0.0
    %263 = vmatpush.msra.mxu0 0.0
    %264 = vmatpush.msra.mxu0 0.0
    %265 = vmatpush.msra.mxu0 0.0
    %266 = vmatpush.msra.mxu0 0.0
    %267 = vmatpush.msra.mxu0 %v108
    %268 = vmatmul.f32.gmra.mxu0 %v250
    %v269 = vpop.f32.mrf.mxu0
    %v270 = vadd.f32 0.0, %v269
    %271 = vdwg.mxu0
    %273 = vset.pattern.permute.xlu0 0
    %274 = vperm.xlu0 %273, %v243
    %v275 = vpop.permute.xlu0 %274
    %v276 = vperm.slane %v275, %v187
    %v277 = vsel %vm249, %v276, 0
    %279 = vmatpush.msra.mxu0 0.0
    %280 = vmatpush.msra.mxu0 0.0
    %281 = vmatpush.msra.mxu0 0.0
    %282 = vmatpush.msra.mxu0 0.0
    %283 = vmatpush.msra.mxu0 0.0
    %284 = vmatpush.msra.mxu0 0.0
    %285 = vmatpush.msra.mxu0 0.0
    %286 = vmatpush.msra.mxu0 0.0
    %287 = vmatpush.msra.mxu0 0.0
    %288 = vmatpush.msra.mxu0 0.0
    %289 = vmatpush.msra.mxu0 0.0
    %290 = vmatpush.msra.mxu0 0.0
    %291 = vmatpush.msra.mxu0 0.0
    %292 = vmatpush.msra.mxu0 0.0
    %293 = vmatpush.msra.mxu0 0.0
    %294 = vmatpush.msra.mxu0 %v109
    %295 = vmatmul.f32.gmra.mxu0 %v277
    %v296 = vpop.f32.mrf.mxu0
    %v297 = vadd.f32 0.0, %v296
    %298 = vdwg.mxu0
    %v301 = vrot.slane %v297, 7
    %v302 = vsel %vm190, %v301, %v270
    %v303 = vsel %vm142, %v302, 0
    %305 = vmatpush.msra.mxu0 0.0
    %306 = vmatpush.msra.mxu0 0.0
    %307 = vmatpush.msra.mxu0 0.0
    %308 = vmatpush.msra.mxu0 0.0
    %309 = vmatpush.msra.mxu0 0.0
    %310 = vmatpush.msra.mxu0 0.0
    %311 = vmatpush.msra.mxu0 0.0
    %312 = vmatpush.msra.mxu0 0.0
    %313 = vmatpush.msra.mxu0 0.0
    %314 = vmatpush.msra.mxu0 0.0
    %315 = vmatpush.msra.mxu0 0.0
    %316 = vmatpush.msra.mxu0 0.0
    %317 = vmatpush.msra.mxu0 %v134
    %318 = vmatpush.msra.mxu0 %v132
    %319 = vmatpush.msra.mxu0 %v130
    %320 = vmatpush.msra.mxu0 %v128
    %321 = vmatmul.f32.gmra.mxu0 %v303
    %v322 = vpop.f32.mrf.mxu0
    %v323 = vadd.f32 0.0, %v322
    %324 = vdwg.mxu0
    %325 = vmatpush.msra.mxu0 0.0
    %326 = vmatpush.msra.mxu0 0.0
    %327 = vmatpush.msra.mxu0 0.0
    %328 = vmatpush.msra.mxu0 0.0
    %329 = vmatpush.msra.mxu0 0.0
    %330 = vmatpush.msra.mxu0 0.0
    %331 = vmatpush.msra.mxu0 0.0
    %332 = vmatpush.msra.mxu0 0.0
    %333 = vmatpush.msra.mxu0 0.0
    %334 = vmatpush.msra.mxu0 0.0
    %335 = vmatpush.msra.mxu0 0.0
    %336 = vmatpush.msra.mxu0 0.0
    %337 = vmatpush.msra.mxu0 %v135
    %338 = vmatpush.msra.mxu0 %v133
    %339 = vmatpush.msra.mxu0 %v131
    %340 = vmatpush.msra.mxu0 %v129
    %341 = vmatmul.f32.gmra.mxu0 %v303
    %v342 = vpop.f32.mrf.mxu0
    %v343 = vadd.f32 0.0, %v342
    %344 = vdwg.mxu0
    %345 = vmatpush.msra.mxu0 0.0
    %346 = vmatpush.msra.mxu0 0.0
    %347 = vmatpush.msra.mxu0 0.0
    %348 = vmatpush.msra.mxu0 0.0
    %349 = vmatpush.msra.mxu0 0.0
    %350 = vmatpush.msra.mxu0 0.0
    %351 = vmatpush.msra.mxu0 0.0
    %352 = vmatpush.msra.mxu0 0.0
    %353 = vmatpush.msra.mxu0 0.0
    %354 = vmatpush.msra.mxu0 0.0
    %355 = vmatpush.msra.mxu0 0.0
    %356 = vmatpush.msra.mxu0 0.0
    %357 = vmatpush.msra.mxu0 %v126
    %358 = vmatpush.msra.mxu0 %v124
    %359 = vmatpush.msra.mxu0 %v122
    %360 = vmatpush.msra.mxu0 %v120
    %361 = vmatmul.f32.gmra.mxu0 %v144
    %v362 = vpop.f32.mrf.mxu0
    %v363 = vadd.f32 %v323, %v362
    %364 = vdwg.mxu0
    %365 = vmatpush.msra.mxu0 0.0
    %366 = vmatpush.msra.mxu0 0.0
    %367 = vmatpush.msra.mxu0 0.0
    %368 = vmatpush.msra.mxu0 0.0
    %369 = vmatpush.msra.mxu0 0.0
    %370 = vmatpush.msra.mxu0 0.0
    %371 = vmatpush.msra.mxu0 0.0
    %372 = vmatpush.msra.mxu0 0.0
    %373 = vmatpush.msra.mxu0 0.0
    %374 = vmatpush.msra.mxu0 0.0
    %375 = vmatpush.msra.mxu0 0.0
    %376 = vmatpush.msra.mxu0 0.0
    %377 = vmatpush.msra.mxu0 %v127
    %378 = vmatpush.msra.mxu0 %v125
    %379 = vmatpush.msra.mxu0 %v123
    %380 = vmatpush.msra.mxu0 %v121
    %381 = vmatmul.f32.gmra.mxu0 %v144
    %v382 = vpop.f32.mrf.mxu0
    %v383 = vadd.f32 %v343, %v382
    %384 = vdwg.mxu0
    %v385 = vadd.f32 %v363, %v138
    %v386 = vadd.f32 %v383, %v139
    %388 = vrot.lane.b32.xlu0 %v385, 32
    %v389 = vpop.permute.xlu0 %388
    %v391 = vadd.f32 %v385, %v389
    %v392 = vxor.u32 %v391, 2147483648
    %v393 = vmul.f32 %v392, 1.442695
    %v394 = vpow.pop %v393
    %v395 = vadd.f32 %v394, 1.0
    %v396 = vrcp.pop %v395
    %v397 = vmul.f32 %v395, %v396
    %v398 = vsub.f32 1.0, %v397
    %v399 = vmul.f32 %v396, %v398
    %v400 = vadd.f32 %v396, %v399
    %vm401 = vweird.f32 %v395
    %vm402 = vweird.f32 %v396
    %vm403 = vmor %vm401, %vm402
    %v404 = vsel %vm403, %v396, %v400
    %v405 = vand.u32 2147483647, %v395
    %vm406 = vcmp.eq.f32.partialorder %v405, 8.507059e+37
    %v407 = vand.u32 %v395, 2147483648
    %v408 = vor.u32 1.1754944e-38, %v407
    %v409 = vsel %vm406, %v408, %v404
    %v410 = vmul.f32 1.0, %v409
    %412 = vrot.lane.b32.xlu0 %v386, 32
    %v413 = vpop.permute.xlu0 %412
    %v415 = vadd.f32 %v385, %v413
    %v416 = vxor.u32 %v415, 2147483648
    %v417 = vmul.f32 %v416, 1.442695
    %v418 = vpow.pop %v417
    %v419 = vadd.f32 %v418, 1.0
    %v420 = vrcp.pop %v419
    %v421 = vmul.f32 %v419, %v420
    %v422 = vsub.f32 1.0, %v421
    %v423 = vmul.f32 %v420, %v422
    %v424 = vadd.f32 %v420, %v423
    %vm425 = vweird.f32 %v419
    %vm426 = vweird.f32 %v420
    %vm427 = vmor %vm425, %vm426
    %v428 = vsel %vm427, %v420, %v424
    %v429 = vand.u32 2147483647, %v419
    %vm430 = vcmp.eq.f32.partialorder %v429, 8.507059e+37
    %v431 = vand.u32 %v419, 2147483648
    %v432 = vor.u32 1.1754944e-38, %v431
    %v433 = vsel %vm430, %v432, %v428
    %v434 = vmul.f32 1.0, %v433
    %435 = vrot.lane.b32.xlu0 %v386, 96
    %v436 = vpop.permute.xlu0 %435
    %v438 = vmul.f32 %v410, %v436
    %440 = vrot.lane.b32.xlu0 %v438, 64
    %v441 = vpop.permute.xlu0 %440
    %v443 = vadd.f32 %v385, %v441
    %v444 = vtanh.pop %v443
    %v445 = vsub.f32 1.0, %v434
    %447 = vrot.lane.b32.xlu0 %v444, 96
    %v448 = vpop.permute.xlu0 %447
    %v450 = vmul.f32 %v445, %v448
    %v451 = vmul.f32 %v434, 0.0
    %v452 = vadd.f32 %v450, %v451
    %454 = vrot.lane.b32.xlu0 %v452, 96
    %v455 = vpop.permute.xlu0 %454
    %vm457 = vcmask 254976
    %458 = vst.msk [vmem:[#allocation11] sm:$0x3] %vm457, %v455
    %v459 = vsel %vm190, %v276, %v248
    %461 = vst.msk [vmem:[#allocation12] sm:$0x3] %vm193, %v459
    %v462 = vsel %vm142, %v455, 0
    %464 = vmatpush.msra.mxu0 0.0
    %465 = vmatpush.msra.mxu0 0.0
    %466 = vmatpush.msra.mxu0 0.0
    %467 = vmatpush.msra.mxu0 0.0
    %468 = vmatpush.msra.mxu0 0.0
    %469 = vmatpush.msra.mxu0 0.0
    %470 = vmatpush.msra.mxu0 0.0
    %471 = vmatpush.msra.mxu0 0.0
    %472 = vmatpush.msra.mxu0 0.0
    %473 = vmatpush.msra.mxu0 0.0
    %474 = vmatpush.msra.mxu0 0.0
    %475 = vmatpush.msra.mxu0 0.0
    %476 = vmatpush.msra.mxu0 %v115
    %477 = vmatpush.msra.mxu0 %v114
    %478 = vmatpush.msra.mxu0 %v113
    %479 = vmatpush.msra.mxu0 %v112
    %480 = vmatmul.f32.gmra.mxu0 %v462
    %v481 = vpop.f32.mrf.mxu0
    %v482 = vadd.f32 0.0, %v481
    %483 = vdwg.mxu0
    %v485 = vrot.slane %v482, 1
    %v486 = vperm.slane %v482, 0
    %v487 = vperm.slane %v485, 0
    %v490 = vadd.f32 %v486, %v110
    %v491 = vadd.f32 %v487, %v111
    %v492 = vtanh.pop %v490
    %v493 = vtanh.pop %v491
    %v494 = vmul.f32 %v492, %v118
    %v495 = vmul.f32 %v493, %v118
    %v496 = vsel %vm142, %v494, 0.0
    %497 = vadd.xlane.f32.xlu0 %v496
    %v498 = vpop.xlane.xlu0 %497
    %v499 = vsel %vm142, %v495, 0.0
    %500 = vadd.xlane.f32.xlu0 %v499
    %v501 = vpop.xlane.xlu0 %500
    %v504 = vperm.slane %v498, %v187
    %v505 = vperm.slane %v501, %v187
    %v506 = vsel %vm190, %v505, %v504
    %v508 = vsel %vm193, %v506, -inf
    %509 = vmax.xlane.f32.xlu0 %v508
    %v510 = vpop.xlane.xlu0 %509
    %v512 = vperm.slane %v510, 0
    %v513 = vperm.slane %v510, 1
    %v516 = vsub.f32 %v498, %v512
    %v517 = vsub.f32 %v501, %v513
    %v518 = vmul.f32 %v516, 1.442695
    %v519 = vpow.pop %v518
    %v520 = vmul.f32 %v517, 1.442695
    %v521 = vpow.pop %v520
    %524 = vset.pattern.permute.xlu0 0
    %525 = vperm.xlu0 %524, %v519
    %v526 = vpop.permute.xlu0 %525
    %527 = vset.pattern.permute.xlu0 0
    %528 = vperm.xlu0 %527, %v521
    %v529 = vpop.permute.xlu0 %528
    %v530 = vperm.slane %v526, %v187
    %v531 = vperm.slane %v529, %v187
    %v532 = vsel %vm190, %v531, %v530
    %v534 = vsel %vm193, %v532, 0.0
    %535 = vadd.xlane.f32.xlu0 %v534
    %v536 = vpop.xlane.xlu0 %535
    %v537 = vrcp.pop %v536
    %v538 = vmul.f32 %v536, %v537
    %v539 = vsub.f32 1.0, %v538
    %v540 = vmul.f32 %v537, %v539
    %v541 = vadd.f32 %v537, %v540
    %vm542 = vweird.f32 %v536
    %vm543 = vweird.f32 %v537
    %vm544 = vmor %vm542, %vm543
    %v545 = vsel %vm544, %v537, %v541
    %v546 = vand.u32 2147483647, %v536
    %vm547 = vcmp.eq.f32.partialorder %v546, 8.507059e+37
    %v548 = vand.u32 %v536, 2147483648
    %v549 = vor.u32 1.1754944e-38, %v548
    %v550 = vsel %vm547, %v549, %v545
    %v552 = vperm.slane %v550, 0
    %v553 = vperm.slane %v550, 1
    %v556 = vmul.f32 %v519, %v552
    %v557 = vmul.f32 %v521, %v553
    %559 = vset.pattern.permute.xlu0 0
    %560 = vperm.xlu0 %559, %v556
    %v561 = vpop.permute.xlu0 %560
    %v562 = vperm.slane %v561, %v187
    %v563 = vsel %vm249, %v562, 0
    %565 = vmatpush.msra.mxu0 0.0
    %566 = vmatpush.msra.mxu0 0.0
    %567 = vmatpush.msra.mxu0 0.0
    %568 = vmatpush.msra.mxu0 0.0
    %569 = vmatpush.msra.mxu0 0.0
    %570 = vmatpush.msra.mxu0 0.0
    %571 = vmatpush.msra.mxu0 0.0
    %572 = vmatpush.msra.mxu0 0.0
    %573 = vmatpush.msra.mxu0 0.0
    %574 = vmatpush.msra.mxu0 0.0
    %575 = vmatpush.msra.mxu0 0.0
    %576 = vmatpush.msra.mxu0 0.0
    %577 = vmatpush.msra.mxu0 0.0
    %578 = vmatpush.msra.mxu0 0.0
    %579 = vmatpush.msra.mxu0 0.0
    %580 = vmatpush.msra.mxu0 %v108
    %581 = vmatmul.f32.gmra.mxu0 %v563
    %v582 = vpop.f32.mrf.mxu0
    %v583 = vadd.f32 0.0, %v582
    %584 = vdwg.mxu0
    %586 = vset.pattern.permute.xlu0 0
    %587 = vperm.xlu0 %586, %v557
    %v588 = vpop.permute.xlu0 %587
    %v589 = vperm.slane %v588, %v187
    %v590 = vsel %vm249, %v589, 0
    %592 = vmatpush.msra.mxu0 0.0
    %593 = vmatpush.msra.mxu0 0.0
    %594 = vmatpush.msra.mxu0 0.0
    %595 = vmatpush.msra.mxu0 0.0
    %596 = vmatpush.msra.mxu0 0.0
    %597 = vmatpush.msra.mxu0 0.0
    %598 = vmatpush.msra.mxu0 0.0
    %599 = vmatpush.msra.mxu0 0.0
    %600 = vmatpush.msra.mxu0 0.0
    %601 = vmatpush.msra.mxu0 0.0
    %602 = vmatpush.msra.mxu0 0.0
    %603 = vmatpush.msra.mxu0 0.0
    %604 = vmatpush.msra.mxu0 0.0
    %605 = vmatpush.msra.mxu0 0.0
    %606 = vmatpush.msra.mxu0 0.0
    %607 = vmatpush.msra.mxu0 %v109
    %608 = vmatmul.f32.gmra.mxu0 %v590
    %v609 = vpop.f32.mrf.mxu0
    %v610 = vadd.f32 0.0, %v609
    %611 = vdwg.mxu0
    %v614 = vrot.slane %v610, 7
    %v615 = vsel %vm190, %v614, %v583
    %v616 = vsel %vm142, %v615, 0
    %618 = vmatpush.msra.mxu0 0.0
    %619 = vmatpush.msra.mxu0 0.0
    %620 = vmatpush.msra.mxu0 0.0
    %621 = vmatpush.msra.mxu0 0.0
    %622 = vmatpush.msra.mxu0 0.0
    %623 = vmatpush.msra.mxu0 0.0
    %624 = vmatpush.msra.mxu0 0.0
    %625 = vmatpush.msra.mxu0 0.0
    %626 = vmatpush.msra.mxu0 0.0
    %627 = vmatpush.msra.mxu0 0.0
    %628 = vmatpush.msra.mxu0 0.0
    %629 = vmatpush.msra.mxu0 0.0
    %630 = vmatpush.msra.mxu0 %v134
    %631 = vmatpush.msra.mxu0 %v132
    %632 = vmatpush.msra.mxu0 %v130
    %633 = vmatpush.msra.mxu0 %v128
    %634 = vmatmul.f32.gmra.mxu0 %v616
    %v635 = vpop.f32.mrf.mxu0
    %v636 = vadd.f32 0.0, %v635
    %637 = vdwg.mxu0
    %638 = vmatpush.msra.mxu0 0.0
    %639 = vmatpush.msra.mxu0 0.0
    %640 = vmatpush.msra.mxu0 0.0
    %641 = vmatpush.msra.mxu0 0.0
    %642 = vmatpush.msra.mxu0 0.0
    %643 = vmatpush.msra.mxu0 0.0
    %644 = vmatpush.msra.mxu0 0.0
    %645 = vmatpush.msra.mxu0 0.0
    %646 = vmatpush.msra.mxu0 0.0
    %647 = vmatpush.msra.mxu0 0.0
    %648 = vmatpush.msra.mxu0 0.0
    %649 = vmatpush.msra.mxu0 0.0
    %650 = vmatpush.msra.mxu0 %v135
    %651 = vmatpush.msra.mxu0 %v133
    %652 = vmatpush.msra.mxu0 %v131
    %653 = vmatpush.msra.mxu0 %v129
    %654 = vmatmul.f32.gmra.mxu0 %v616
    %v655 = vpop.f32.mrf.mxu0
    %v656 = vadd.f32 0.0, %v655
    %657 = vdwg.mxu0
    %658 = vmatpush.msra.mxu0 0.0
    %659 = vmatpush.msra.mxu0 0.0
    %660 = vmatpush.msra.mxu0 0.0
    %661 = vmatpush.msra.mxu0 0.0
    %662 = vmatpush.msra.mxu0 0.0
    %663 = vmatpush.msra.mxu0 0.0
    %664 = vmatpush.msra.mxu0 0.0
    %665 = vmatpush.msra.mxu0 0.0
    %666 = vmatpush.msra.mxu0 0.0
    %667 = vmatpush.msra.mxu0 0.0
    %668 = vmatpush.msra.mxu0 0.0
    %669 = vmatpush.msra.mxu0 0.0
    %670 = vmatpush.msra.mxu0 %v126
    %671 = vmatpush.msra.mxu0 %v124
    %672 = vmatpush.msra.mxu0 %v122
    %673 = vmatpush.msra.mxu0 %v120
    %674 = vmatmul.f32.gmra.mxu0 %v462
    %v675 = vpop.f32.mrf.mxu0
    %v676 = vadd.f32 %v636, %v675
    %677 = vdwg.mxu0
    %678 = vmatpush.msra.mxu0 0.0
    %679 = vmatpush.msra.mxu0 0.0
    %680 = vmatpush.msra.mxu0 0.0
    %681 = vmatpush.msra.mxu0 0.0
    %682 = vmatpush.msra.mxu0 0.0
    %683 = vmatpush.msra.mxu0 0.0
    %684 = vmatpush.msra.mxu0 0.0
    %685 = vmatpush.msra.mxu0 0.0
    %686 = vmatpush.msra.mxu0 0.0
    %687 = vmatpush.msra.mxu0 0.0
    %688 = vmatpush.msra.mxu0 0.0
    %689 = vmatpush.msra.mxu0 0.0
    %690 = vmatpush.msra.mxu0 %v127
    %691 = vmatpush.msra.mxu0 %v125
    %692 = vmatpush.msra.mxu0 %v123
    %693 = vmatpush.msra.mxu0 %v121
    %694 = vmatmul.f32.gmra.mxu0 %v462
    %v695 = vpop.f32.mrf.mxu0
    %v696 = vadd.f32 %v656, %v695
    %697 = vdwg.mxu0
    %v698 = vadd.f32 %v676, %v138
    %v699 = vadd.f32 %v696, %v139
    %701 = vrot.lane.b32.xlu0 %v698, 32
    %v702 = vpop.permute.xlu0 %701
    %v704 = vadd.f32 %v698, %v702
    %v705 = vxor.u32 %v704, 2147483648
    %v706 = vmul.f32 %v705, 1.442695
    %v707 = vpow.pop %v706
    %v708 = vadd.f32 %v707, 1.0
    %v709 = vrcp.pop %v708
    %v710 = vmul.f32 %v708, %v709
    %v711 = vsub.f32 1.0, %v710
    %v712 = vmul.f32 %v709, %v711
    %v713 = vadd.f32 %v709, %v712
    %vm714 = vweird.f32 %v708
    %vm715 = vweird.f32 %v709
    %vm716 = vmor %vm714, %vm715
    %v717 = vsel %vm716, %v709, %v713
    %v718 = vand.u32 2147483647, %v708
    %vm719 = vcmp.eq.f32.partialorder %v718, 8.507059e+37
    %v720 = vand.u32 %v708, 2147483648
    %v721 = vor.u32 1.1754944e-38, %v720
    %v722 = vsel %vm719, %v721, %v717
    %v723 = vmul.f32 1.0, %v722
    %725 = vrot.lane.b32.xlu0 %v699, 32
    %v726 = vpop.permute.xlu0 %725
    %v728 = vadd.f32 %v698, %v726
    %v729 = vxor.u32 %v728, 2147483648
    %v730 = vmul.f32 %v729, 1.442695
    %v731 = vpow.pop %v730
    %v732 = vadd.f32 %v731, 1.0
    %v733 = vrcp.pop %v732
    %v734 = vmul.f32 %v732, %v733
    %v735 = vsub.f32 1.0, %v734
    %v736 = vmul.f32 %v733, %v735
    %v737 = vadd.f32 %v733, %v736
    %vm738 = vweird.f32 %v732
    %vm739 = vweird.f32 %v733
    %vm740 = vmor %vm738, %vm739
    %v741 = vsel %vm740, %v733, %v737
    %v742 = vand.u32 2147483647, %v732
    %vm743 = vcmp.eq.f32.partialorder %v742, 8.507059e+37
    %v744 = vand.u32 %v732, 2147483648
    %v745 = vor.u32 1.1754944e-38, %v744
    %v746 = vsel %vm743, %v745, %v741
    %v747 = vmul.f32 1.0, %v746
    %748 = vrot.lane.b32.xlu0 %v699, 96
    %v749 = vpop.permute.xlu0 %748
    %v751 = vmul.f32 %v723, %v749
    %753 = vrot.lane.b32.xlu0 %v751, 64
    %v754 = vpop.permute.xlu0 %753
    %v756 = vadd.f32 %v698, %v754
    %v757 = vtanh.pop %v756
    %v758 = vsub.f32 1.0, %v747
    %760 = vrot.lane.b32.xlu0 %v757, 96
    %v761 = vpop.permute.xlu0 %760
    %v763 = vmul.f32 %v758, %v761
    %v764 = vmul.f32 %v747, %v452
    %v765 = vadd.f32 %v763, %v764
    %767 = vrot.lane.b32.xlu0 %v765, 96
    %v768 = vpop.permute.xlu0 %767
    %s770 = scalar_lea.vmem [#allocation11], 2
    %771 = vst.msk [vmem:[%s770] sm:$0x3] %vm457, %v768
    %v772 = vsel %vm190, %v589, %v562
    %774 = vst.msk [vmem:[#allocation12] sm:$0x3] %vm193, %v772
    %v775 = vsel %vm142, %v768, 0
    %777 = vmatpush.msra.mxu0 0.0
    %778 = vmatpush.msra.mxu0 0.0
    %779 = vmatpush.msra.mxu0 0.0
    %780 = vmatpush.msra.mxu0 0.0
    %781 = vmatpush.msra.mxu0 0.0
    %782 = vmatpush.msra.mxu0 0.0
    %783 = vmatpush.msra.mxu0 0.0
    %784 = vmatpush.msra.mxu0 0.0
    %785 = vmatpush.msra.mxu0 0.0
    %786 = vmatpush.msra.mxu0 0.0
    %787 = vmatpush.msra.mxu0 0.0
    %788 = vmatpush.msra.mxu0 0.0
    %789 = vmatpush.msra.mxu0 %v115
    %790 = vmatpush.msra.mxu0 %v114
    %791 = vmatpush.msra.mxu0 %v113
    %792 = vmatpush.msra.mxu0 %v112
    %793 = vmatmul.f32.gmra.mxu0 %v775
    %v794 = vpop.f32.mrf.mxu0
    %v795 = vadd.f32 0.0, %v794
    %796 = vdwg.mxu0
    %v798 = vrot.slane %v795, 1
    %v799 = vperm.slane %v795, 0
    %v800 = vperm.slane %v798, 0
    %v803 = vadd.f32 %v799, %v110
    %v804 = vadd.f32 %v800, %v111
    %v805 = vtanh.pop %v803
    %v806 = vtanh.pop %v804
    %v807 = vmul.f32 %v805, %v118
    %v808 = vmul.f32 %v806, %v118
    %v809 = vsel %vm142, %v807, 0.0
    %810 = vadd.xlane.f32.xlu0 %v809
    %v811 = vpop.xlane.xlu0 %810
    %v812 = vsel %vm142, %v808, 0.0
    %813 = vadd.xlane.f32.xlu0 %v812
    %v814 = vpop.xlane.xlu0 %813
    %v817 = vperm.slane %v811, %v187
    %v818 = vperm.slane %v814, %v187
    %v819 = vsel %vm190, %v818, %v817
    %v821 = vsel %vm193, %v819, -inf
    %822 = vmax.xlane.f32.xlu0 %v821
    %v823 = vpop.xlane.xlu0 %822
    %v825 = vperm.slane %v823, 0
    %v826 = vperm.slane %v823, 1
    %v829 = vsub.f32 %v811, %v825
    %v830 = vsub.f32 %v814, %v826
    %v831 = vmul.f32 %v829, 1.442695
    %v832 = vpow.pop %v831
    %v833 = vmul.f32 %v830, 1.442695
    %v834 = vpow.pop %v833
    %837 = vset.pattern.permute.xlu0 0
    %838 = vperm.xlu0 %837, %v832
    %v839 = vpop.permute.xlu0 %838
    %840 = vset.pattern.permute.xlu0 0
    %841 = vperm.xlu0 %840, %v834
    %v842 = vpop.permute.xlu0 %841
    %v843 = vperm.slane %v839, %v187
    %v844 = vperm.slane %v842, %v187
    %v845 = vsel %vm190, %v844, %v843
    %v847 = vsel %vm193, %v845, 0.0
    %848 = vadd.xlane.f32.xlu0 %v847
    %v849 = vpop.xlane.xlu0 %848
    %v850 = vrcp.pop %v849
    %v851 = vmul.f32 %v849, %v850
    %v852 = vsub.f32 1.0, %v851
    %v853 = vmul.f32 %v850, %v852
    %v854 = vadd.f32 %v850, %v853
    %vm855 = vweird.f32 %v849
    %vm856 = vweird.f32 %v850
    %vm857 = vmor %vm855, %vm856
    %v858 = vsel %vm857, %v850, %v854
    %v859 = vand.u32 2147483647, %v849
    %vm860 = vcmp.eq.f32.partialorder %v859, 8.507059e+37
    %v861 = vand.u32 %v849, 2147483648
    %v862 = vor.u32 1.1754944e-38, %v861
    %v863 = vsel %vm860, %v862, %v858
    %v865 = vperm.slane %v863, 0
    %v866 = vperm.slane %v863, 1
    %v869 = vmul.f32 %v832, %v865
    %v870 = vmul.f32 %v834, %v866
    %872 = vset.pattern.permute.xlu0 0
    %873 = vperm.xlu0 %872, %v869
    %v874 = vpop.permute.xlu0 %873
    %v875 = vperm.slane %v874, %v187
    %v876 = vsel %vm249, %v875, 0
    %878 = vmatpush.msra.mxu0 0.0
    %879 = vmatpush.msra.mxu0 0.0
    %880 = vmatpush.msra.mxu0 0.0
    %881 = vmatpush.msra.mxu0 0.0
    %882 = vmatpush.msra.mxu0 0.0
    %883 = vmatpush.msra.mxu0 0.0
    %884 = vmatpush.msra.mxu0 0.0
    %885 = vmatpush.msra.mxu0 0.0
    %886 = vmatpush.msra.mxu0 0.0
    %887 = vmatpush.msra.mxu0 0.0
    %888 = vmatpush.msra.mxu0 0.0
    %889 = vmatpush.msra.mxu0 0.0
    %890 = vmatpush.msra.mxu0 0.0
    %891 = vmatpush.msra.mxu0 0.0
    %892 = vmatpush.msra.mxu0 0.0
    %893 = vmatpush.msra.mxu0 %v108
    %894 = vmatmul.f32.gmra.mxu0 %v876
    %v895 = vpop.f32.mrf.mxu0
    %v896 = vadd.f32 0.0, %v895
    %897 = vdwg.mxu0
    %899 = vset.pattern.permute.xlu0 0
    %900 = vperm.xlu0 %899, %v870
    %v901 = vpop.permute.xlu0 %900
    %v902 = vperm.slane %v901, %v187
    %v903 = vsel %vm249, %v902, 0
    %905 = vmatpush.msra.mxu0 0.0
    %906 = vmatpush.msra.mxu0 0.0
    %907 = vmatpush.msra.mxu0 0.0
    %908 = vmatpush.msra.mxu0 0.0
    %909 = vmatpush.msra.mxu0 0.0
    %910 = vmatpush.msra.mxu0 0.0
    %911 = vmatpush.msra.mxu0 0.0
    %912 = vmatpush.msra.mxu0 0.0
    %913 = vmatpush.msra.mxu0 0.0
    %914 = vmatpush.msra.mxu0 0.0
    %915 = vmatpush.msra.mxu0 0.0
    %916 = vmatpush.msra.mxu0 0.0
    %917 = vmatpush.msra.mxu0 0.0
    %918 = vmatpush.msra.mxu0 0.0
    %919 = vmatpush.msra.mxu0 0.0
    %920 = vmatpush.msra.mxu0 %v109
    %921 = vmatmul.f32.gmra.mxu0 %v903
    %v922 = vpop.f32.mrf.mxu0
    %v923 = vadd.f32 0.0, %v922
    %924 = vdwg.mxu0
    %v927 = vrot.slane %v923, 7
    %v928 = vsel %vm190, %v927, %v896
    %v929 = vsel %vm142, %v928, 0
    %931 = vmatpush.msra.mxu0 0.0
    %932 = vmatpush.msra.mxu0 0.0
    %933 = vmatpush.msra.mxu0 0.0
    %934 = vmatpush.msra.mxu0 0.0
    %935 = vmatpush.msra.mxu0 0.0
    %936 = vmatpush.msra.mxu0 0.0
    %937 = vmatpush.msra.mxu0 0.0
    %938 = vmatpush.msra.mxu0 0.0
    %939 = vmatpush.msra.mxu0 0.0
    %940 = vmatpush.msra.mxu0 0.0
    %941 = vmatpush.msra.mxu0 0.0
    %942 = vmatpush.msra.mxu0 0.0
    %943 = vmatpush.msra.mxu0 %v134
    %944 = vmatpush.msra.mxu0 %v132
    %945 = vmatpush.msra.mxu0 %v130
    %946 = vmatpush.msra.mxu0 %v128
    %947 = vmatmul.f32.gmra.mxu0 %v929
    %v948 = vpop.f32.mrf.mxu0
    %v949 = vadd.f32 0.0, %v948
    %950 = vdwg.mxu0
    %951 = vmatpush.msra.mxu0 0.0
    %952 = vmatpush.msra.mxu0 0.0
    %953 = vmatpush.msra.mxu0 0.0
    %954 = vmatpush.msra.mxu0 0.0
    %955 = vmatpush.msra.mxu0 0.0
    %956 = vmatpush.msra.mxu0 0.0
    %957 = vmatpush.msra.mxu0 0.0
    %958 = vmatpush.msra.mxu0 0.0
    %959 = vmatpush.msra.mxu0 0.0
    %960 = vmatpush.msra.mxu0 0.0
    %961 = vmatpush.msra.mxu0 0.0
    %962 = vmatpush.msra.mxu0 0.0
    %963 = vmatpush.msra.mxu0 %v135
    %964 = vmatpush.msra.mxu0 %v133
    %965 = vmatpush.msra.mxu0 %v131
    %966 = vmatpush.msra.mxu0 %v129
    %967 = vmatmul.f32.gmra.mxu0 %v929
    %v968 = vpop.f32.mrf.mxu0
    %v969 = vadd.f32 0.0, %v968
    %970 = vdwg.mxu0
    %971 = vmatpush.msra.mxu0 0.0
    %972 = vmatpush.msra.mxu0 0.0
    %973 = vmatpush.msra.mxu0 0.0
    %974 = vmatpush.msra.mxu0 0.0
    %975 = vmatpush.msra.mxu0 0.0
    %976 = vmatpush.msra.mxu0 0.0
    %977 = vmatpush.msra.mxu0 0.0
    %978 = vmatpush.msra.mxu0 0.0
    %979 = vmatpush.msra.mxu0 0.0
    %980 = vmatpush.msra.mxu0 0.0
    %981 = vmatpush.msra.mxu0 0.0
    %982 = vmatpush.msra.mxu0 0.0
    %983 = vmatpush.msra.mxu0 %v126
    %984 = vmatpush.msra.mxu0 %v124
    %985 = vmatpush.msra.mxu0 %v122
    %986 = vmatpush.msra.mxu0 %v120
    %987 = vmatmul.f32.gmra.mxu0 %v775
    %v988 = vpop.f32.mrf.mxu0
    %v989 = vadd.f32 %v949, %v988
    %990 = vdwg.mxu0
    %991 = vmatpush.msra.mxu0 0.0
    %992 = vmatpush.msra.mxu0 0.0
    %993 = vmatpush.msra.mxu0 0.0
    %994 = vmatpush.msra.mxu0 0.0
    %995 = vmatpush.msra.mxu0 0.0
    %996 = vmatpush.msra.mxu0 0.0
    %997 = vmatpush.msra.mxu0 0.0
    %998 = vmatpush.msra.mxu0 0.0
    %999 = vmatpush.msra.mxu0 0.0
    %1000 = vmatpush.msra.mxu0 0.0
    %1001 = vmatpush.msra.mxu0 0.0
    %1002 = vmatpush.msra.mxu0 0.0
    %1003 = vmatpush.msra.mxu0 %v127
    %1004 = vmatpush.msra.mxu0 %v125
    %1005 = vmatpush.msra.mxu0 %v123
    %1006 = vmatpush.msra.mxu0 %v121
    %1007 = vmatmul.f32.gmra.mxu0 %v775
    %v1008 = vpop.f32.mrf.mxu0
    %v1009 = vadd.f32 %v969, %v1008
    %1010 = vdwg.mxu0
    %v1011 = vadd.f32 %v989, %v138
    %v1012 = vadd.f32 %v1009, %v139
    %1014 = vrot.lane.b32.xlu0 %v1011, 32
    %v1015 = vpop.permute.xlu0 %1014
    %v1017 = vadd.f32 %v1011, %v1015
    %v1018 = vxor.u32 %v1017, 2147483648
    %v1019 = vmul.f32 %v1018, 1.442695
    %v1020 = vpow.pop %v1019
    %v1021 = vadd.f32 %v1020, 1.0
    %v1022 = vrcp.pop %v1021
    %v1023 = vmul.f32 %v1021, %v1022
    %v1024 = vsub.f32 1.0, %v1023
    %v1025 = vmul.f32 %v1022, %v1024
    %v1026 = vadd.f32 %v1022, %v1025
    %vm1027 = vweird.f32 %v1021
    %vm1028 = vweird.f32 %v1022
    %vm1029 = vmor %vm1027, %vm1028
    %v1030 = vsel %vm1029, %v1022, %v1026
    %v1031 = vand.u32 2147483647, %v1021
    %vm1032 = vcmp.eq.f32.partialorder %v1031, 8.507059e+37
    %v1033 = vand.u32 %v1021, 2147483648
    %v1034 = vor.u32 1.1754944e-38, %v1033
    %v1035 = vsel %vm1032, %v1034, %v1030
    %v1036 = vmul.f32 1.0, %v1035
    %1038 = vrot.lane.b32.xlu0 %v1012, 32
    %v1039 = vpop.permute.xlu0 %1038
    %v1041 = vadd.f32 %v1011, %v1039
    %v1042 = vxor.u32 %v1041, 2147483648
    %v1043 = vmul.f32 %v1042, 1.442695
    %v1044 = vpow.pop %v1043
    %v1045 = vadd.f32 %v1044, 1.0
    %v1046 = vrcp.pop %v1045
    %v1047 = vmul.f32 %v1045, %v1046
    %v1048 = vsub.f32 1.0, %v1047
    %v1049 = vmul.f32 %v1046, %v1048
    %v1050 = vadd.f32 %v1046, %v1049
    %vm1051 = vweird.f32 %v1045
    %vm1052 = vweird.f32 %v1046
    %vm1053 = vmor %vm1051, %vm1052
    %v1054 = vsel %vm1053, %v1046, %v1050
    %v1055 = vand.u32 2147483647, %v1045
    %vm1056 = vcmp.eq.f32.partialorder %v1055, 8.507059e+37
    %v1057 = vand.u32 %v1045, 2147483648
    %v1058 = vor.u32 1.1754944e-38, %v1057
    %v1059 = vsel %vm1056, %v1058, %v1054
    %v1060 = vmul.f32 1.0, %v1059
    %1061 = vrot.lane.b32.xlu0 %v1012, 96
    %v1062 = vpop.permute.xlu0 %1061
    %v1064 = vmul.f32 %v1036, %v1062
    %1066 = vrot.lane.b32.xlu0 %v1064, 64
    %v1067 = vpop.permute.xlu0 %1066
    %v1069 = vadd.f32 %v1011, %v1067
    %v1070 = vtanh.pop %v1069
    %v1071 = vsub.f32 1.0, %v1060
    %1073 = vrot.lane.b32.xlu0 %v1070, 96
    %v1074 = vpop.permute.xlu0 %1073
    %v1076 = vmul.f32 %v1071, %v1074
    %v1077 = vmul.f32 %v1060, %v765
    %v1078 = vadd.f32 %v1076, %v1077
    %1080 = vrot.lane.b32.xlu0 %v1078, 96
    %v1081 = vpop.permute.xlu0 %1080
    %s1083 = scalar_lea.vmem [#allocation11], 4
    %1084 = vst.msk [vmem:[%s1083] sm:$0x3] %vm457, %v1081
    %v1085 = vsel %vm190, %v902, %v875
    %1087 = vst.msk [vmem:[#allocation12] sm:$0x3] %vm193, %v1085
    %v1088 = vsel %vm142, %v1081, 0
    %1090 = vmatpush.msra.mxu0 0.0
    %1091 = vmatpush.msra.mxu0 0.0
    %1092 = vmatpush.msra.mxu0 0.0
    %1093 = vmatpush.msra.mxu0 0.0
    %1094 = vmatpush.msra.mxu0 0.0
    %1095 = vmatpush.msra.mxu0 0.0
    %1096 = vmatpush.msra.mxu0 0.0
    %1097 = vmatpush.msra.mxu0 0.0
    %1098 = vmatpush.msra.mxu0 0.0
    %1099 = vmatpush.msra.mxu0 0.0
    %1100 = vmatpush.msra.mxu0 0.0
    %1101 = vmatpush.msra.mxu0 0.0
    %1102 = vmatpush.msra.mxu0 %v115
    %1103 = vmatpush.msra.mxu0 %v114
    %1104 = vmatpush.msra.mxu0 %v113
    %1105 = vmatpush.msra.mxu0 %v112
    %1106 = vmatmul.f32.gmra.mxu0 %v1088
    %v1107 = vpop.f32.mrf.mxu0
    %v1108 = vadd.f32 0.0, %v1107
    %1109 = vdwg.mxu0
    %v1111 = vrot.slane %v1108, 1
    %v1112 = vperm.slane %v1108, 0
    %v1113 = vperm.slane %v1111, 0
    %v1116 = vadd.f32 %v1112, %v110
    %v1117 = vadd.f32 %v1113, %v111
    %v1118 = vtanh.pop %v1116
    %v1119 = vtanh.pop %v1117
    %v1120 = vmul.f32 %v1118, %v118
    %v1121 = vmul.f32 %v1119, %v118
    %v1122 = vsel %vm142, %v1120, 0.0
    %1123 = vadd.xlane.f32.xlu0 %v1122
    %v1124 = vpop.xlane.xlu0 %1123
    %v1125 = vsel %vm142, %v1121, 0.0
    %1126 = vadd.xlane.f32.xlu0 %v1125
    %v1127 = vpop.xlane.xlu0 %1126
    %v1130 = vperm.slane %v1124, %v187
    %v1131 = vperm.slane %v1127, %v187
    %v1132 = vsel %vm190, %v1131, %v1130
    %v1134 = vsel %vm193, %v1132, -inf
    %1135 = vmax.xlane.f32.xlu0 %v1134
    %v1136 = vpop.xlane.xlu0 %1135
    %v1138 = vperm.slane %v1136, 0
    %v1139 = vperm.slane %v1136, 1
    %v1142 = vsub.f32 %v1124, %v1138
    %v1143 = vsub.f32 %v1127, %v1139
    %v1144 = vmul.f32 %v1142, 1.442695
    %v1145 = vpow.pop %v1144
    %v1146 = vmul.f32 %v1143, 1.442695
    %v1147 = vpow.pop %v1146
    %1150 = vset.pattern.permute.xlu0 0
    %1151 = vperm.xlu0 %1150, %v1145
    %v1152 = vpop.permute.xlu0 %1151
    %1153 = vset.pattern.permute.xlu0 0
    %1154 = vperm.xlu0 %1153, %v1147
    %v1155 = vpop.permute.xlu0 %1154
    %v1156 = vperm.slane %v1152, %v187
    %v1157 = vperm.slane %v1155, %v187
    %v1158 = vsel %vm190, %v1157, %v1156
    %v1160 = vsel %vm193, %v1158, 0.0
    %1161 = vadd.xlane.f32.xlu0 %v1160
    %v1162 = vpop.xlane.xlu0 %1161
    %v1163 = vrcp.pop %v1162
    %v1164 = vmul.f32 %v1162, %v1163
    %v1165 = vsub.f32 1.0, %v1164
    %v1166 = vmul.f32 %v1163, %v1165
    %v1167 = vadd.f32 %v1163, %v1166
    %vm1168 = vweird.f32 %v1162
    %vm1169 = vweird.f32 %v1163
    %vm1170 = vmor %vm1168, %vm1169
    %v1171 = vsel %vm1170, %v1163, %v1167
    %v1172 = vand.u32 2147483647, %v1162
    %vm1173 = vcmp.eq.f32.partialorder %v1172, 8.507059e+37
    %v1174 = vand.u32 %v1162, 2147483648
    %v1175 = vor.u32 1.1754944e-38, %v1174
    %v1176 = vsel %vm1173, %v1175, %v1171
    %v1178 = vperm.slane %v1176, 0
    %v1179 = vperm.slane %v1176, 1
    %v1182 = vmul.f32 %v1145, %v1178
    %v1183 = vmul.f32 %v1147, %v1179
    %1185 = vset.pattern.permute.xlu0 0
    %1186 = vperm.xlu0 %1185, %v1182
    %v1187 = vpop.permute.xlu0 %1186
    %v1188 = vperm.slane %v1187, %v187
    %v1189 = vsel %vm249, %v1188, 0
    %1191 = vmatpush.msra.mxu0 0.0
    %1192 = vmatpush.msra.mxu0 0.0
    %1193 = vmatpush.msra.mxu0 0.0
    %1194 = vmatpush.msra.mxu0 0.0
    %1195 = vmatpush.msra.mxu0 0.0
    %1196 = vmatpush.msra.mxu0 0.0
    %1197 = vmatpush.msra.mxu0 0.0
    %1198 = vmatpush.msra.mxu0 0.0
    %1199 = vmatpush.msra.mxu0 0.0
    %1200 = vmatpush.msra.mxu0 0.0
    %1201 = vmatpush.msra.mxu0 0.0
    %1202 = vmatpush.msra.mxu0 0.0
    %1203 = vmatpush.msra.mxu0 0.0
    %1204 = vmatpush.msra.mxu0 0.0
    %1205 = vmatpush.msra.mxu0 0.0
    %1206 = vmatpush.msra.mxu0 %v108
    %1207 = vmatmul.f32.gmra.mxu0 %v1189
    %v1208 = vpop.f32.mrf.mxu0
    %v1209 = vadd.f32 0.0, %v1208
    %1210 = vdwg.mxu0
    %1212 = vset.pattern.permute.xlu0 0
    %1213 = vperm.xlu0 %1212, %v1183
    %v1214 = vpop.permute.xlu0 %1213
    %v1215 = vperm.slane %v1214, %v187
    %v1216 = vsel %vm249, %v1215, 0
    %1218 = vmatpush.msra.mxu0 0.0
    %1219 = vmatpush.msra.mxu0 0.0
    %1220 = vmatpush.msra.mxu0 0.0
    %1221 = vmatpush.msra.mxu0 0.0
    %1222 = vmatpush.msra.mxu0 0.0
    %1223 = vmatpush.msra.mxu0 0.0
    %1224 = vmatpush.msra.mxu0 0.0
    %1225 = vmatpush.msra.mxu0 0.0
    %1226 = vmatpush.msra.mxu0 0.0
    %1227 = vmatpush.msra.mxu0 0.0
    %1228 = vmatpush.msra.mxu0 0.0
    %1229 = vmatpush.msra.mxu0 0.0
    %1230 = vmatpush.msra.mxu0 0.0
    %1231 = vmatpush.msra.mxu0 0.0
    %1232 = vmatpush.msra.mxu0 0.0
    %1233 = vmatpush.msra.mxu0 %v109
    %1234 = vmatmul.f32.gmra.mxu0 %v1216
    %v1235 = vpop.f32.mrf.mxu0
    %v1236 = vadd.f32 0.0, %v1235
    %1237 = vdwg.mxu0
    %v1240 = vrot.slane %v1236, 7
    %v1241 = vsel %vm190, %v1240, %v1209
    %v1242 = vsel %vm142, %v1241, 0
    %1244 = vmatpush.msra.mxu0 0.0
    %1245 = vmatpush.msra.mxu0 0.0
    %1246 = vmatpush.msra.mxu0 0.0
    %1247 = vmatpush.msra.mxu0 0.0
    %1248 = vmatpush.msra.mxu0 0.0
    %1249 = vmatpush.msra.mxu0 0.0
    %1250 = vmatpush.msra.mxu0 0.0
    %1251 = vmatpush.msra.mxu0 0.0
    %1252 = vmatpush.msra.mxu0 0.0
    %1253 = vmatpush.msra.mxu0 0.0
    %1254 = vmatpush.msra.mxu0 0.0
    %1255 = vmatpush.msra.mxu0 0.0
    %1256 = vmatpush.msra.mxu0 %v134
    %1257 = vmatpush.msra.mxu0 %v132
    %1258 = vmatpush.msra.mxu0 %v130
    %1259 = vmatpush.msra.mxu0 %v128
    %1260 = vmatmul.f32.gmra.mxu0 %v1242
    %v1261 = vpop.f32.mrf.mxu0
    %v1262 = vadd.f32 0.0, %v1261
    %1263 = vdwg.mxu0
    %1264 = vmatpush.msra.mxu0 0.0
    %1265 = vmatpush.msra.mxu0 0.0
    %1266 = vmatpush.msra.mxu0 0.0
    %1267 = vmatpush.msra.mxu0 0.0
    %1268 = vmatpush.msra.mxu0 0.0
    %1269 = vmatpush.msra.mxu0 0.0
    %1270 = vmatpush.msra.mxu0 0.0
    %1271 = vmatpush.msra.mxu0 0.0
    %1272 = vmatpush.msra.mxu0 0.0
    %1273 = vmatpush.msra.mxu0 0.0
    %1274 = vmatpush.msra.mxu0 0.0
    %1275 = vmatpush.msra.mxu0 0.0
    %1276 = vmatpush.msra.mxu0 %v135
    %1277 = vmatpush.msra.mxu0 %v133
    %1278 = vmatpush.msra.mxu0 %v131
    %1279 = vmatpush.msra.mxu0 %v129
    %1280 = vmatmul.f32.gmra.mxu0 %v1242
    %v1281 = vpop.f32.mrf.mxu0
    %v1282 = vadd.f32 0.0, %v1281
    %1283 = vdwg.mxu0
    %1284 = vmatpush.msra.mxu0 0.0
    %1285 = vmatpush.msra.mxu0 0.0
    %1286 = vmatpush.msra.mxu0 0.0
    %1287 = vmatpush.msra.mxu0 0.0
    %1288 = vmatpush.msra.mxu0 0.0
    %1289 = vmatpush.msra.mxu0 0.0
    %1290 = vmatpush.msra.mxu0 0.0
    %1291 = vmatpush.msra.mxu0 0.0
    %1292 = vmatpush.msra.mxu0 0.0
    %1293 = vmatpush.msra.mxu0 0.0
    %1294 = vmatpush.msra.mxu0 0.0
    %1295 = vmatpush.msra.mxu0 0.0
    %1296 = vmatpush.msra.mxu0 %v126
    %1297 = vmatpush.msra.mxu0 %v124
    %1298 = vmatpush.msra.mxu0 %v122
    %1299 = vmatpush.msra.mxu0 %v120
    %1300 = vmatmul.f32.gmra.mxu0 %v1088
    %v1301 = vpop.f32.mrf.mxu0
    %v1302 = vadd.f32 %v1262, %v1301
    %1303 = vdwg.mxu0
    %1304 = vmatpush.msra.mxu0 0.0
    %1305 = vmatpush.msra.mxu0 0.0
    %1306 = vmatpush.msra.mxu0 0.0
    %1307 = vmatpush.msra.mxu0 0.0
    %1308 = vmatpush.msra.mxu0 0.0
    %1309 = vmatpush.msra.mxu0 0.0
    %1310 = vmatpush.msra.mxu0 0.0
    %1311 = vmatpush.msra.mxu0 0.0
    %1312 = vmatpush.msra.mxu0 0.0
    %1313 = vmatpush.msra.mxu0 0.0
    %1314 = vmatpush.msra.mxu0 0.0
    %1315 = vmatpush.msra.mxu0 0.0
    %1316 = vmatpush.msra.mxu0 %v127
    %1317 = vmatpush.msra.mxu0 %v125
    %1318 = vmatpush.msra.mxu0 %v123
    %1319 = vmatpush.msra.mxu0 %v121
    %1320 = vmatmul.f32.gmra.mxu0 %v1088
    %v1321 = vpop.f32.mrf.mxu0
    %v1322 = vadd.f32 %v1282, %v1321
    %1323 = vdwg.mxu0
    %v1324 = vadd.f32 %v1302, %v138
    %v1325 = vadd.f32 %v1322, %v139
    %1327 = vrot.lane.b32.xlu0 %v1324, 32
    %v1328 = vpop.permute.xlu0 %1327
    %v1330 = vadd.f32 %v1324, %v1328
    %v1331 = vxor.u32 %v1330, 2147483648
    %v1332 = vmul.f32 %v1331, 1.442695
    %v1333 = vpow.pop %v1332
    %v1334 = vadd.f32 %v1333, 1.0
    %v1335 = vrcp.pop %v1334
    %v1336 = vmul.f32 %v1334, %v1335
    %v1337 = vsub.f32 1.0, %v1336
    %v1338 = vmul.f32 %v1335, %v1337
    %v1339 = vadd.f32 %v1335, %v1338
    %vm1340 = vweird.f32 %v1334
    %vm1341 = vweird.f32 %v1335
    %vm1342 = vmor %vm1340, %vm1341
    %v1343 = vsel %vm1342, %v1335, %v1339
    %v1344 = vand.u32 2147483647, %v1334
    %vm1345 = vcmp.eq.f32.partialorder %v1344, 8.507059e+37
    %v1346 = vand.u32 %v1334, 2147483648
    %v1347 = vor.u32 1.1754944e-38, %v1346
    %v1348 = vsel %vm1345, %v1347, %v1343
    %v1349 = vmul.f32 1.0, %v1348
    %1351 = vrot.lane.b32.xlu0 %v1325, 32
    %v1352 = vpop.permute.xlu0 %1351
    %v1354 = vadd.f32 %v1324, %v1352
    %v1355 = vxor.u32 %v1354, 2147483648
    %v1356 = vmul.f32 %v1355, 1.442695
    %v1357 = vpow.pop %v1356
    %v1358 = vadd.f32 %v1357, 1.0
    %v1359 = vrcp.pop %v1358
    %v1360 = vmul.f32 %v1358, %v1359
    %v1361 = vsub.f32 1.0, %v1360
    %v1362 = vmul.f32 %v1359, %v1361
    %v1363 = vadd.f32 %v1359, %v1362
    %vm1364 = vweird.f32 %v1358
    %vm1365 = vweird.f32 %v1359
    %vm1366 = vmor %vm1364, %vm1365
    %v1367 = vsel %vm1366, %v1359, %v1363
    %v1368 = vand.u32 2147483647, %v1358
    %vm1369 = vcmp.eq.f32.partialorder %v1368, 8.507059e+37
    %v1370 = vand.u32 %v1358, 2147483648
    %v1371 = vor.u32 1.1754944e-38, %v1370
    %v1372 = vsel %vm1369, %v1371, %v1367
    %v1373 = vmul.f32 1.0, %v1372
    %1374 = vrot.lane.b32.xlu0 %v1325, 96
    %v1375 = vpop.permute.xlu0 %1374
    %v1377 = vmul.f32 %v1349, %v1375
    %1379 = vrot.lane.b32.xlu0 %v1377, 64
    %v1380 = vpop.permute.xlu0 %1379
    %v1382 = vadd.f32 %v1324, %v1380
    %v1383 = vtanh.pop %v1382
    %v1384 = vsub.f32 1.0, %v1373
    %1386 = vrot.lane.b32.xlu0 %v1383, 96
    %v1387 = vpop.permute.xlu0 %1386
    %v1389 = vmul.f32 %v1384, %v1387
    %v1390 = vmul.f32 %v1373, %v1078
    %v1391 = vadd.f32 %v1389, %v1390
    %1393 = vrot.lane.b32.xlu0 %v1391, 96
    %v1394 = vpop.permute.xlu0 %1393
    %s1396 = scalar_lea.vmem [#allocation11], 6
    %1397 = vst.msk [vmem:[%s1396] sm:$0x3] %vm457, %v1394
    %v1398 = vsel %vm190, %v1215, %v1188
    %1400 = vst.msk [vmem:[#allocation12] sm:$0x3] %vm193, %v1398
    // Predicated region
    $region50: #{tpu_custom_call.1} parent=1 // pred_check
      _
    $region51: #{tpu_custom_call.1} parent=1 // pred_check_branch
      %1402 = sbr.rel (0) target = $region53
    $region52: #{tpu_custom_call.1} parent=1 // pred_region
      %1404 = vsyncadd [#allocation4], 0
      %s1405 = sshll.u32 [#allocation11], 4
      %s1406 = int_to_ptr.vmem [resolvable:$true] %s1405
      %s1407 = sshll.u32 %s7, 4
      %s1408 = int_to_ptr.hbm [resolvable:$true] %s1407
      %1413 = dma.vmem_to_hbm [thread:$0]  %s1406, 128, %s1408, [#allocation4], 32, 32, 2
    $region53: #{tpu_custom_call.1} parent=1 // pred_fallthru
      _
    // Predicated region
    $region54: #{tpu_custom_call.1} parent=1 // pred_check
      _
    $region55: #{tpu_custom_call.1} parent=1 // pred_check_branch
      %1415 = sbr.rel (0) target = $region57
    $region56: #{tpu_custom_call.1} parent=1 // pred_region
      %1417 = vsyncadd [#allocation13], 0
      %s1419 = sshll.u32 [#allocation12], 4
      %s1420 = int_to_ptr.vmem [resolvable:$true] %s1419
      %s1421 = sshll.u32 %s8, 4
      %s1422 = int_to_ptr.hbm [resolvable:$true] %s1421
      %1424 = dma.vmem_to_hbm [thread:$0]  %s1420, 32, %s1422, [#allocation13]
    $region57: #{tpu_custom_call.1} parent=1 // pred_fallthru
      _
    // Predicated region
    $region58: #{tpu_custom_call.1} parent=1 // pred_check
      _
    $region59: #{tpu_custom_call.1} parent=1 // pred_check_branch
      %1426 = sbr.rel (0) target = $region61
    $region60: #{tpu_custom_call.1} parent=1 // pred_region
      %1428 = dma.done [#allocation4], 128
    $region61: #{tpu_custom_call.1} parent=1 // pred_fallthru
      _
    // Predicated region
    $region62: #{tpu_custom_call.1} parent=1 // pred_check
      _
    $region63: #{tpu_custom_call.1} parent=1 // pred_check_branch
      %1430 = sbr.rel (0) target = $region65
    $region64: #{tpu_custom_call.1} parent=1 // pred_region
      %1432 = dma.done [#allocation13], 32
    $region65: #{tpu_custom_call.1} parent=1 // pred_fallthru
      _
    %1433 = vsyncpa [#allocation3], 1
    %1434 = vsyncpa [#allocation6], 1
    %1435 = vsyncpa [#allocation9], 1
    %1436 = vsyncpa [#allocation4], 1
    %1437 = vsyncpa [#allocation13], 1

</llo_original>
